<compile_context>
chip_gen: v7x
topology: tpu7x:2x2x1
jax: 0.10.0
libtpu: 0.0.40
codegen_flags: <defaults>
</compile_context>

<pallas_src>
import functools
import math

import jax
import jax.numpy as jnp
from jax.experimental import pallas as pl
from jax.experimental.pallas import tpu as pltpu


# ----------------------------- Pallas kernel -------------------------------

def _decoder_only_kernel(x_ref, wqkv_ref, bqkv_ref, wo_ref, bo_ref,
                         mask_ref, wout_ref, bout_ref, out_ref, xres_ref,
                         *, n_head):
    """One (batch_block, layer) grid step of the fused decoder forward.

    x_ref:    [Bblk, S, D]  f32 embedded activations (read only at l == 0)
    wqkv_ref: [1, D, 3D]    bf16 fused Q/K/V weights of layer l (Q pre-scaled)
    bqkv_ref: [1, 1, 3D]    f32  fused Q/K/V biases of layer l (Q pre-scaled)
    wo_ref:   [1, D, D]     bf16 output-projection weight of layer l
    bo_ref:   [1, 1, D]     f32  output-projection bias of layer l
    mask_ref: [S, S]        f32  additive mask bias (0 or -1e9)
    wout_ref: [D, Tp]       bf16 classifier weight, lane-padded to Tp
    bout_ref: [1, Tp]       f32  classifier bias (-1e30 in padded columns)
    out_ref:  [Bblk, S, Tp] f32  softmax probabilities (written at last layer)
    xres_ref: [Bblk*S, D]   f32  VMEM residual stream carried across layers
    """
    l = pl.program_id(1)
    n_layers = pl.num_programs(1)
    b_blk, seq, d_model = x_ref.shape
    dh = d_model // n_head
    m_rows = b_blk * seq
    t_pad = out_ref.shape[-1]

    # First layer of this batch block: load activations into the residual.
    @pl.when(l == 0)
    def _():
        xres_ref[...] = x_ref[...].reshape(m_rows, d_model)

    x = xres_ref[...]                                     # [M, D] f32
    xb = x.astype(jnp.bfloat16)

    # Fused QKV projection, batch folded into the MXU M dimension.
    qkv = jnp.dot(xb, wqkv_ref[0],
                  preferred_element_type=jnp.float32) + bqkv_ref[0]   # [M, 3D]
    qkv = qkv.astype(jnp.bfloat16).reshape(b_blk, seq, 3 * d_model)

    # Head split without sublane transposes: concatenate per-head lane slices
    # along a leading (head, batch) axis -> [H*Bblk, S, dh] batched einsums.
    def heads(base):
        return jnp.concatenate(
            [qkv[:, :, base + h * dh: base + (h + 1) * dh]
             for h in range(n_head)], axis=0)
    qh = heads(0)                 # 1/sqrt(d_model) already folded into weights
    kh = heads(d_model)
    vh = heads(2 * d_model)

    s = jnp.einsum('bqd,bkd->bqk', qh, kh,
                   preferred_element_type=jnp.float32)    # [H*Bblk, S, S] f32
    s = s + mask_ref[...][None]                           # additive mask
    m = jnp.max(s, axis=-1, keepdims=True)
    p = jnp.exp(s - m)
    p = p * pl.reciprocal(jnp.sum(p, axis=-1, keepdims=True), approx=True)
    o = jnp.einsum('bqk,bkd->bqd', p.astype(jnp.bfloat16), vh,
                   preferred_element_type=jnp.float32)    # [H*Bblk, S, dh]

    attn = jnp.concatenate(
        [o[h * b_blk:(h + 1) * b_blk] for h in range(n_head)],
        axis=-1)                                          # [Bblk, S, D]
    proj = jnp.dot(attn.reshape(m_rows, d_model).astype(jnp.bfloat16),
                   wo_ref[0], preferred_element_type=jnp.float32) + bo_ref[0]
    x = x + proj                                          # residual, f32
    xres_ref[...] = x

    # After the last layer: classifier + exact softmax, lane-dense store.
    @pl.when(l == n_layers - 1)
    def _():
        logits = jnp.dot(x.astype(jnp.bfloat16), wout_ref[...],
                         preferred_element_type=jnp.float32) + bout_ref[...]
        mm = jnp.max(logits, axis=-1, keepdims=True)
        e = jnp.exp(logits - mm)                 # padded cols: exp(-1e30) == 0
        probs = e / jnp.sum(e, axis=-1, keepdims=True)    # exact for output
        out_ref[...] = probs.reshape(b_blk, seq, t_pad)


def _decoder_only_call(x_bsd, wqkv, bqkv, wo, bo, mask_bias, wout, bout,
                       *, n_head, b_block):
    B, S, D = x_bsd.shape
    L = wqkv.shape[0]
    Tp = wout.shape[1]
    grid_b = B // b_block
    kernel = functools.partial(_decoder_only_kernel, n_head=n_head)
    return pl.pallas_call(
        kernel,
        out_shape=jax.ShapeDtypeStruct((B, S, Tp), jnp.float32),
        grid_spec=pltpu.PrefetchScalarGridSpec(
            num_scalar_prefetch=0,
            grid=(grid_b, L),
            in_specs=[
                pl.BlockSpec((b_block, S, D), lambda b, l: (b, 0, 0)),  # activations
                pl.BlockSpec((1, D, 3 * D), lambda b, l: (l, 0, 0)),    # QKV W (layer l)
                pl.BlockSpec((1, 1, 3 * D), lambda b, l: (l, 0, 0)),    # QKV b (layer l)
                pl.BlockSpec((1, D, D), lambda b, l: (l, 0, 0)),        # out-proj W
                pl.BlockSpec((1, 1, D), lambda b, l: (l, 0, 0)),        # out-proj b
                pl.BlockSpec((S, S), lambda b, l: (0, 0)),              # mask bias
                pl.BlockSpec((D, Tp), lambda b, l: (0, 0)),             # classifier W
                pl.BlockSpec((1, Tp), lambda b, l: (0, 0)),             # classifier b
            ],
            out_specs=pl.BlockSpec((b_block, S, Tp), lambda b, l: (b, 0, 0)),
            scratch_shapes=[pltpu.VMEM((b_block * S, D), jnp.float32)],  # residual
        ),
        compiler_params=pltpu.CompilerParams(
            # batch blocks can shard across TCs; layer axis is a serial carry.
            dimension_semantics=("parallel", "arbitrary"),
            # Tiny at toy shapes; re-derive (per-layer weights x2 buffers +
            # activations + [H*Bblk,S,S] scores) before scaling S/D/L.
            vmem_limit_bytes=32 * 1024 * 1024,
        ),
    )(x_bsd, wqkv, bqkv, wo, bo, mask_bias, wout, bout)


def _pick_batch_block(batch, seq_len, target_rows=256):
    """Largest divisor of `batch` whose block keeps M = Bblk*S near target."""
    bblk = max(1, min(batch, max(1, target_rows // max(seq_len, 1))))
    while batch % bblk:
        bblk -= 1
    return bblk


# ----------------------------- Host wrappers -------------------------------

def positional_embedding(d_model, max_len=27):
    numerator = jnp.arange(max_len, dtype=jnp.float32).reshape(-1, 1)
    denominator = jnp.exp(
        jnp.arange(0, d_model, 2, dtype=jnp.float32) *
        (-math.log(10000.0) / d_model)).reshape(1, -1)
    val = numerator @ denominator                           # [max_len, d_model//2]
    pe = jnp.zeros((max_len, 1, d_model), jnp.float32)
    pe = pe.at[:, 0, 0::2].set(jnp.sin(val))
    pe = pe.at[:, 0, 1::2].set(jnp.cos(val))
    return pe


def init_params(key, d_model, n_token, n_layers):
    params = {}
    key, k = jax.random.split(key)
    params['embed'] = jax.random.normal(k, (n_token, d_model), jnp.float32) * 0.1
    layers = []
    for _ in range(n_layers):
        lp = {}
        for name in ('wq', 'wk', 'wv', 'wo'):
            key, k = jax.random.split(key)
            lp[name] = (jax.random.normal(k, (d_model, d_model), jnp.float32)
                        / math.sqrt(d_model))
        for name in ('bq', 'bk', 'bv', 'bo'):
            key, k = jax.random.split(key)
            lp[name] = jax.random.normal(k, (1, d_model), jnp.float32) * 0.01
        layers.append(lp)
    params['layers'] = layers
    key, k = jax.random.split(key)
    params['w_out'] = (jax.random.normal(k, (d_model, n_token), jnp.float32)
                       / math.sqrt(d_model))
    key, k = jax.random.split(key)
    params['b_out'] = jax.random.normal(k, (1, n_token), jnp.float32) * 0.01
    return params


def prepare_params(params, *, d_model, n_token):
    """One-time weight transform: stack per-layer weights, fuse QKV, fold the
    1/sqrt(d_model) scale into the Q columns, cast matmul operands to bf16 and
    lane-pad the classifier to a multiple of 128."""
    scale = 1.0 / math.sqrt(d_model)
    layers = params['layers']
    wqkv = jnp.stack([
        jnp.concatenate([lp['wq'] * scale, lp['wk'], lp['wv']], axis=1)
        for lp in layers]).astype(jnp.bfloat16)                      # [L, D, 3D]
    bqkv = jnp.stack([
        jnp.concatenate([lp['bq'] * scale, lp['bk'], lp['bv']], axis=1)
        for lp in layers]).astype(jnp.float32)                       # [L, 1, 3D]
    wo = jnp.stack([lp['wo'] for lp in layers]).astype(jnp.bfloat16)  # [L, D, D]
    bo = jnp.stack([lp['bo'] for lp in layers]).astype(jnp.float32)   # [L, 1, D]
    n_pad = ((n_token + 127) // 128) * 128
    wout = (jnp.zeros((d_model, n_pad), jnp.float32)
            .at[:, :n_token].set(params['w_out'])).astype(jnp.bfloat16)
    bout = (jnp.full((1, n_pad), -1e30, jnp.float32)
            .at[:, :n_token].set(params['b_out']))
    return {'embed': params['embed'], 'wqkv': wqkv, 'bqkv': bqkv,
            'wo': wo, 'bo': bo, 'w_out': wout, 'b_out': bout}


@functools.partial(jax.jit, static_argnames=('n_head', 'd_model', 'n_token'))
def decoder_only_forward(fused, tokens_sb, mask_ss, *, n_head, d_model, n_token):
    """tokens_sb: [S, B] int32 token ids; mask_ss: [S, S] bool (True = masked).

    Returns [S, B, n_token] f32 probabilities (PyTorch layout).
    """
    S, B = tokens_sb.shape
    emb = fused['embed'][tokens_sb]                         # [S, B, D] gather (glue)
    x = emb + positional_embedding(d_model)[:S]             # [S, B, D]
    x = jnp.transpose(x, (1, 0, 2)).astype(jnp.float32)     # -> [B, S, D]
    mask_bias = jnp.where(mask_ss, -1e9, 0.0).astype(jnp.float32)
    b_block = _pick_batch_block(B, S)
    probs = _decoder_only_call(
        x, fused['wqkv'], fused['bqkv'], fused['wo'], fused['bo'],
        mask_bias, fused['w_out'], fused['b_out'],
        n_head=n_head, b_block=b_block)
    probs = probs[:, :, :n_token]                           # drop lane padding
    return jnp.transpose(probs, (1, 0, 2))                  # -> [S, B, T]


def reference_forward(params, tokens_sb, mask_ss, *, n_head, d_model):
    """Pure-JAX f32 reference matching the PyTorch module semantics."""
    S, B = tokens_sb.shape
    dh = d_model // n_head
    scale = 1.0 / math.sqrt(d_model)
    x = params['embed'][tokens_sb] + positional_embedding(d_model)[:S]  # [S, B, D]
    for lp in params['layers']:
        q = x @ lp['wq'] + lp['bq']
        k = x @ lp['wk'] + lp['bk']
        v = x @ lp['wv'] + lp['bv']

        def split(t):  # 's b (h d) -> (b h) s d'
            return jnp.transpose(t.reshape(S, B, n_head, dh),
                                 (1, 2, 0, 3)).reshape(B * n_head, S, dh)
        qh, kh, vh = split(q), split(k), split(v)
        s = jnp.einsum('bsd,btd->bst', qh, kh) * scale
        s = jnp.where(mask_ss[None], -jnp.inf, s)
        p = jax.nn.softmax(s, axis=-1)
        o = jnp.einsum('bst,btd->bsd', p, vh)
        o = jnp.transpose(o.reshape(B, n_head, S, dh),
                          (2, 0, 1, 3)).reshape(S, B, d_model)
        x = x + (o @ lp['wo'] + lp['bo'])
    logits = x @ params['w_out'] + params['b_out']
    return jax.nn.softmax(logits, axis=-1)                  # [S, B, T]


# --------------------------------- main ------------------------------------

if __name__ == "__main__":
    d_model, n_token, n_head, n_layers = 64, 16, 4, 2
    seq_len, batch = 8, 2

    key = jax.random.PRNGKey(0)
    key, pk, tk = jax.random.split(key, 3)
    params = init_params(pk, d_model, n_token, n_layers)
    fused = prepare_params(params, d_model=d_model, n_token=n_token)

    tokens = jax.random.randint(tk, (seq_len, batch), 0, n_token, dtype=jnp.int32)
    # Causal mask: True above the diagonal (future positions are masked out).
    mask = jnp.triu(jnp.ones((seq_len, seq_len), dtype=bool), k=1)

    out = decoder_only_forward(fused, tokens, mask,
                               n_head=n_head, d_model=d_model, n_token=n_token)
    out = jax.block_until_ready(out)

    assert out.shape == (seq_len, batch, n_token)
    # Output softmax uses exact f32 division -> rows sum to 1 tightly.
    assert bool(jnp.allclose(jnp.sum(out, axis=-1), 1.0, atol=1e-3))
    # Match the pure-JAX f32 reference (bf16 matmuls -> loose tolerance).
    ref = reference_forward(params, tokens, mask, n_head=n_head, d_model=d_model)
    assert bool(jnp.allclose(out, ref, atol=3e-2))
    print("KERNEL_OK")
</pallas_src>

<mosaic_0001>
module attributes {stable_mosaic.version = 11 : i64} {
  func.func @_decoder_only_kernel(%arg0: i32, %arg1: i32, %arg2: memref<2x8x64xf32, #tpu.memory_space<vmem>>, %arg3: memref<1x64x192xbf16, #tpu.memory_space<vmem>>, %arg4: memref<1x1x192xf32, #tpu.memory_space<vmem>>, %arg5: memref<1x64x64xbf16, #tpu.memory_space<vmem>>, %arg6: memref<1x1x64xf32, #tpu.memory_space<vmem>>, %arg7: memref<8x8xf32, #tpu.memory_space<vmem>>, %arg8: memref<64x128xbf16, #tpu.memory_space<vmem>>, %arg9: memref<1x128xf32, #tpu.memory_space<vmem>>, %arg10: memref<2x8x128xf32, #tpu.memory_space<vmem>>, %arg11: memref<16x64xf32, #tpu.memory_space<vmem>>) attributes {dimension_semantics = [#tpu.dimension_semantics<parallel>, #tpu.dimension_semantics<arbitrary>], iteration_bounds = array<i64: 1, 2>, scalar_prefetch = 0 : i64, scratch_operands = 1 : i64, tpu.core_type = #tpu.core_type<tc>, window_params = [{transform_indices = @transform_0, window_bounds = array<i64: 2, 8, 64>}, {transform_indices = @transform_1, window_bounds = array<i64: 1, 64, 192>}, {transform_indices = @transform_2, window_bounds = array<i64: 1, 1, 192>}, {transform_indices = @transform_3, window_bounds = array<i64: 1, 64, 64>}, {transform_indices = @transform_4, window_bounds = array<i64: 1, 1, 64>}, {pipeline_mode = #tpu.pipeline_mode<synchronous>, transform_indices = @transform_5, window_bounds = array<i64: 8, 8>}, {pipeline_mode = #tpu.pipeline_mode<synchronous>, transform_indices = @transform_6, window_bounds = array<i64: 64, 128>}, {pipeline_mode = #tpu.pipeline_mode<synchronous>, transform_indices = @transform_7, window_bounds = array<i64: 1, 128>}, {transform_indices = @transform_8, window_bounds = array<i64: 2, 8, 128>}]} {
    %c0_i32 = arith.constant 0 : i32
    %0 = arith.cmpi eq, %arg1, %c0_i32 : i32
    %1 = arith.extui %0 : i1 to i32
    %c0_i32_0 = arith.constant 0 : i32
    %2 = arith.cmpi ne, %1, %c0_i32_0 : i32
    scf.if %2 {
      %c0_24 = arith.constant 0 : index
      %c0_25 = arith.constant 0 : index
      %c0_26 = arith.constant 0 : index
      %65 = vector.load %arg2[%c0_24, %c0_25, %c0_26] : memref<2x8x64xf32, #tpu.memory_space<vmem>>, vector<2x8x64xf32>
      %66 = vector.shape_cast %65 : vector<2x8x64xf32> to vector<16x64xf32>
      %c0_27 = arith.constant 0 : index
      %c0_28 = arith.constant 0 : index
      %67 = vector.load %arg11[%c0_27, %c0_28] : memref<16x64xf32, #tpu.memory_space<vmem>>, vector<16x64xf32>
      tpu.vector_store %arg11[%c0_27, %c0_28], %66 {strides = array<i32>} : memref<16x64xf32, #tpu.memory_space<vmem>>, vector<16x64xf32>,
    } else {
    }
    %c0 = arith.constant 0 : index
    %c0_1 = arith.constant 0 : index
    %3 = vector.load %arg11[%c0, %c0_1] : memref<16x64xf32, #tpu.memory_space<vmem>>, vector<16x64xf32>
    %4 = arith.truncf %3 : vector<16x64xf32> to vector<16x64xbf16>
    %c0_2 = arith.constant 0 : index
    %c0_3 = arith.constant 0 : index
    %c0_4 = arith.constant 0 : index
    %5 = vector.load %arg3[%c0_2, %c0_3, %c0_4] : memref<1x64x192xbf16, #tpu.memory_space<vmem>>, vector<1x64x192xbf16>
    %6 = vector.shape_cast %5 : vector<1x64x192xbf16> to vector<64x192xbf16>
    %cst = arith.constant dense<0.000000e+00> : vector<16x192xf32>
    %7 = tpu.matmul %4, %6, %cst {dimension_numbers = #tpu.dot_dimension_numbers<[1], [0], [0], [1], [0, 0, 1, 1], [], []>} : vector<16x64xbf16>, vector<64x192xbf16>, vector<16x192xf32> -> vector<16x192xf32>
    %c0_5 = arith.constant 0 : index
    %c0_6 = arith.constant 0 : index
    %c0_7 = arith.constant 0 : index
    %8 = vector.load %arg4[%c0_5, %c0_6, %c0_7] : memref<1x1x192xf32, #tpu.memory_space<vmem>>, vector<1x1x192xf32>
    %9 = vector.shape_cast %8 : vector<1x1x192xf32> to vector<1x192xf32>
    %10 = vector.broadcast %9 : vector<1x192xf32> to vector<16x192xf32>
    %11 = arith.addf %7, %10 : vector<16x192xf32>
    %12 = arith.truncf %11 : vector<16x192xf32> to vector<16x192xbf16>
    %13 = vector.shape_cast %12 : vector<16x192xbf16> to vector<2x8x192xbf16>
    %14 = vector.extract_strided_slice %13 {offsets = [0, 0, 0], sizes = [2, 8, 16], strides = [1, 1, 1]} : vector<2x8x192xbf16> to vector<2x8x16xbf16>
    %15 = vector.extract_strided_slice %13 {offsets = [0, 0, 16], sizes = [2, 8, 16], strides = [1, 1, 1]} : vector<2x8x192xbf16> to vector<2x8x16xbf16>
    %16 = vector.extract_strided_slice %13 {offsets = [0, 0, 32], sizes = [2, 8, 16], strides = [1, 1, 1]} : vector<2x8x192xbf16> to vector<2x8x16xbf16>
    %17 = vector.extract_strided_slice %13 {offsets = [0, 0, 48], sizes = [2, 8, 16], strides = [1, 1, 1]} : vector<2x8x192xbf16> to vector<2x8x16xbf16>
    %18 = tpu.concatenate %14, %15, %16, %17 in 0 : vector<2x8x16xbf16>, vector<2x8x16xbf16>, vector<2x8x16xbf16>, vector<2x8x16xbf16> -> vector<8x8x16xbf16>
    %19 = vector.extract_strided_slice %13 {offsets = [0, 0, 64], sizes = [2, 8, 16], strides = [1, 1, 1]} : vector<2x8x192xbf16> to vector<2x8x16xbf16>
    %20 = vector.extract_strided_slice %13 {offsets = [0, 0, 80], sizes = [2, 8, 16], strides = [1, 1, 1]} : vector<2x8x192xbf16> to vector<2x8x16xbf16>
    %21 = vector.extract_strided_slice %13 {offsets = [0, 0, 96], sizes = [2, 8, 16], strides = [1, 1, 1]} : vector<2x8x192xbf16> to vector<2x8x16xbf16>
    %22 = vector.extract_strided_slice %13 {offsets = [0, 0, 112], sizes = [2, 8, 16], strides = [1, 1, 1]} : vector<2x8x192xbf16> to vector<2x8x16xbf16>
    %23 = tpu.concatenate %19, %20, %21, %22 in 0 : vector<2x8x16xbf16>, vector<2x8x16xbf16>, vector<2x8x16xbf16>, vector<2x8x16xbf16> -> vector<8x8x16xbf16>
    %24 = vector.extract_strided_slice %13 {offsets = [0, 0, 128], sizes = [2, 8, 16], strides = [1, 1, 1]} : vector<2x8x192xbf16> to vector<2x8x16xbf16>
    %25 = vector.extract_strided_slice %13 {offsets = [0, 0, 144], sizes = [2, 8, 16], strides = [1, 1, 1]} : vector<2x8x192xbf16> to vector<2x8x16xbf16>
    %26 = vector.extract_strided_slice %13 {offsets = [0, 0, 160], sizes = [2, 8, 16], strides = [1, 1, 1]} : vector<2x8x192xbf16> to vector<2x8x16xbf16>
    %27 = vector.extract_strided_slice %13 {offsets = [0, 0, 176], sizes = [2, 8, 16], strides = [1, 1, 1]} : vector<2x8x192xbf16> to vector<2x8x16xbf16>
    %28 = tpu.concatenate %24, %25, %26, %27 in 0 : vector<2x8x16xbf16>, vector<2x8x16xbf16>, vector<2x8x16xbf16>, vector<2x8x16xbf16> -> vector<8x8x16xbf16>
    "tpu.trace_start"() <{level = 10 : i32, message = "bqd,bkd->bqk"}> : () -> ()
    %cst_8 = arith.constant dense<0.000000e+00> : vector<8x8x8xf32>
    %29 = tpu.matmul %18, %23, %cst_8 {dimension_numbers = #tpu.dot_dimension_numbers<[2], [2], [1], [1], [0, 0, 0, 1, 1, 1], [0], [0]>} : vector<8x8x16xbf16>, vector<8x8x16xbf16>, vector<8x8x8xf32> -> vector<8x8x8xf32>
    "tpu.trace_stop"() : () -> ()
    %c0_9 = arith.constant 0 : index
    %c0_10 = arith.constant 0 : index
    %30 = vector.load %arg7[%c0_9, %c0_10] : memref<8x8xf32, #tpu.memory_space<vmem>>, vector<8x8xf32>
    %31 = vector.shape_cast %30 : vector<8x8xf32> to vector<1x8x8xf32>
    %32 = vector.broadcast %31 : vector<1x8x8xf32> to vector<8x8x8xf32>
    %33 = arith.addf %29, %32 : vector<8x8x8xf32>
    %cst_11 = arith.constant dense<0xFF800000> : vector<8x8xf32>
    %34 = vector.multi_reduction <maximumf>, %33, %cst_11 [2] : vector<8x8x8xf32> to vector<8x8xf32>
    %35 = vector.shape_cast %34 : vector<8x8xf32> to vector<8x8x1xf32>
    %36 = vector.broadcast %35 : vector<8x8x1xf32> to vector<8x8x8xf32>
    %37 = arith.subf %33, %36 : vector<8x8x8xf32>
    %38 = math.exp %37 : vector<8x8x8xf32>
    %cst_12 = arith.constant dense<0.000000e+00> : vector<8x8xf32>
    %39 = vector.multi_reduction <add>, %38, %cst_12 [2] : vector<8x8x8xf32> to vector<8x8xf32>
    %40 = vector.shape_cast %39 : vector<8x8xf32> to vector<8x8x1xf32>
    %41 = tpu.reciprocal %40 {approx = true} : vector<8x8x1xf32> -> vector<8x8x1xf32>
    %42 = vector.broadcast %41 : vector<8x8x1xf32> to vector<8x8x8xf32>
    %43 = arith.mulf %38, %42 : vector<8x8x8xf32>
    %44 = arith.truncf %43 : vector<8x8x8xf32> to vector<8x8x8xbf16>
    "tpu.trace_start"() <{level = 10 : i32, message = "bqk,bkd->bqd"}> : () -> ()
    %cst_13 = arith.constant dense<0.000000e+00> : vector<8x8x16xf32>
    %45 = tpu.matmul %44, %28, %cst_13 {dimension_numbers = #tpu.dot_dimension_numbers<[2], [1], [1], [2], [0, 0, 0, 1, 1, 2], [0], [0]>} : vector<8x8x8xbf16>, vector<8x8x16xbf16>, vector<8x8x16xf32> -> vector<8x8x16xf32>
    "tpu.trace_stop"() : () -> ()
    %46 = vector.extract_strided_slice %45 {offsets = [0, 0, 0], sizes = [2, 8, 16], strides = [1, 1, 1]} : vector<8x8x16xf32> to vector<2x8x16xf32>
    %47 = vector.extract_strided_slice %45 {offsets = [2, 0, 0], sizes = [2, 8, 16], strides = [1, 1, 1]} : vector<8x8x16xf32> to vector<2x8x16xf32>
    %48 = vector.extract_strided_slice %45 {offsets = [4, 0, 0], sizes = [2, 8, 16], strides = [1, 1, 1]} : vector<8x8x16xf32> to vector<2x8x16xf32>
    %49 = vector.extract_strided_slice %45 {offsets = [6, 0, 0], sizes = [2, 8, 16], strides = [1, 1, 1]} : vector<8x8x16xf32> to vector<2x8x16xf32>
    %50 = tpu.concatenate %46, %47, %48, %49 in 2 : vector<2x8x16xf32>, vector<2x8x16xf32>, vector<2x8x16xf32>, vector<2x8x16xf32> -> vector<2x8x64xf32>
    %51 = vector.shape_cast %50 : vector<2x8x64xf32> to vector<16x64xf32>
    %52 = arith.truncf %51 : vector<16x64xf32> to vector<16x64xbf16>
    %c0_14 = arith.constant 0 : index
    %c0_15 = arith.constant 0 : index
    %c0_16 = arith.constant 0 : index
    %53 = vector.load %arg5[%c0_14, %c0_15, %c0_16] : memref<1x64x64xbf16, #tpu.memory_space<vmem>>, vector<1x64x64xbf16>
    %54 = vector.shape_cast %53 : vector<1x64x64xbf16> to vector<64x64xbf16>
    %cst_17 = arith.constant dense<0.000000e+00> : vector<16x64xf32>
    %55 = tpu.matmul %52, %54, %cst_17 {dimension_numbers = #tpu.dot_dimension_numbers<[1], [0], [0], [1], [0, 0, 1, 1], [], []>} : vector<16x64xbf16>, vector<64x64xbf16>, vector<16x64xf32> -> vector<16x64xf32>
    %c0_18 = arith.constant 0 : index
    %c0_19 = arith.constant 0 : index
    %c0_20 = arith.constant 0 : index
    %56 = vector.load %arg6[%c0_18, %c0_19, %c0_20] : memref<1x1x64xf32, #tpu.memory_space<vmem>>, vector<1x1x64xf32>
    %57 = vector.shape_cast %56 : vector<1x1x64xf32> to vector<1x64xf32>
    %58 = vector.broadcast %57 : vector<1x64xf32> to vector<16x64xf32>
    %59 = arith.addf %55, %58 : vector<16x64xf32>
    %60 = arith.addf %3, %59 : vector<16x64xf32>
    %c0_21 = arith.constant 0 : index
    %c0_22 = arith.constant 0 : index
    %61 = vector.load %arg11[%c0_21, %c0_22] : memref<16x64xf32, #tpu.memory_space<vmem>>, vector<16x64xf32>
    tpu.vector_store %arg11[%c0_21, %c0_22], %60 {strides = array<i32>} : memref<16x64xf32, #tpu.memory_space<vmem>>, vector<16x64xf32>,
    %c1_i32 = arith.constant 1 : i32
    %62 = arith.cmpi eq, %arg1, %c1_i32 : i32
    %63 = arith.extui %62 : i1 to i32
    %c0_i32_23 = arith.constant 0 : i32
    %64 = arith.cmpi ne, %63, %c0_i32_23 : i32
    scf.if %64 {
      %65 = arith.truncf %60 : vector<16x64xf32> to vector<16x64xbf16>
      %c0_24 = arith.constant 0 : index
      %c0_25 = arith.constant 0 : index
      %66 = vector.load %arg8[%c0_24, %c0_25] : memref<64x128xbf16, #tpu.memory_space<vmem>>, vector<64x128xbf16>
      %cst_26 = arith.constant dense<0.000000e+00> : vector<16x128xf32>
      %67 = tpu.matmul %65, %66, %cst_26 {dimension_numbers = #tpu.dot_dimension_numbers<[1], [0], [0], [1], [0, 0, 1, 1], [], []>} : vector<16x64xbf16>, vector<64x128xbf16>, vector<16x128xf32> -> vector<16x128xf32>
      %c0_27 = arith.constant 0 : index
      %c0_28 = arith.constant 0 : index
      %68 = vector.load %arg9[%c0_27, %c0_28] : memref<1x128xf32, #tpu.memory_space<vmem>>, vector<1x128xf32>
      %69 = vector.broadcast %68 : vector<1x128xf32> to vector<16x128xf32>
      %70 = arith.addf %67, %69 : vector<16x128xf32>
      %cst_29 = arith.constant dense<0xFF800000> : vector<16xf32>
      %71 = vector.multi_reduction <maximumf>, %70, %cst_29 [1] : vector<16x128xf32> to vector<16xf32>
      %72 = vector.shape_cast %71 : vector<16xf32> to vector<16x1xf32>
      %73 = vector.broadcast %72 : vector<16x1xf32> to vector<16x128xf32>
      %74 = arith.subf %70, %73 : vector<16x128xf32>
      %75 = math.exp %74 : vector<16x128xf32>
      %cst_30 = arith.constant dense<0.000000e+00> : vector<16xf32>
      %76 = vector.multi_reduction <add>, %75, %cst_30 [1] : vector<16x128xf32> to vector<16xf32>
      %77 = vector.shape_cast %76 : vector<16xf32> to vector<16x1xf32>
      %78 = vector.broadcast %77 : vector<16x1xf32> to vector<16x128xf32>
      %79 = arith.divf %75, %78 : vector<16x128xf32>
      %80 = vector.shape_cast %79 : vector<16x128xf32> to vector<2x8x128xf32>
      %c0_31 = arith.constant 0 : index
      %c0_32 = arith.constant 0 : index
      %c0_33 = arith.constant 0 : index
      %81 = vector.load %arg10[%c0_31, %c0_32, %c0_33] : memref<2x8x128xf32, #tpu.memory_space<vmem>>, vector<2x8x128xf32>
      tpu.vector_store %arg10[%c0_31, %c0_32, %c0_33], %80 {strides = array<i32>} : memref<2x8x128xf32, #tpu.memory_space<vmem>>, vector<2x8x128xf32>,
    } else {
    }
    return
  }
  func.func @transform_0(%arg0: i32, %arg1: i32) -> (i32, i32, i32) {
    %c0_i32 = arith.constant 0 : i32
    %c0_i32_0 = arith.constant 0 : i32
    %c0_i32_1 = arith.constant 0 : i32
    return %arg0, %c0_i32, %c0_i32_0 : i32, i32, i32
  }
  func.func @transform_1(%arg0: i32, %arg1: i32) -> (i32, i32, i32) {
    %c0_i32 = arith.constant 0 : i32
    %c0_i32_0 = arith.constant 0 : i32
    %c0_i32_1 = arith.constant 0 : i32
    return %arg1, %c0_i32, %c0_i32_0 : i32, i32, i32
  }
  func.func @transform_2(%arg0: i32, %arg1: i32) -> (i32, i32, i32) {
    %c0_i32 = arith.constant 0 : i32
    %c0_i32_0 = arith.constant 0 : i32
    %c0_i32_1 = arith.constant 0 : i32
    return %arg1, %c0_i32, %c0_i32_0 : i32, i32, i32
  }
  func.func @transform_3(%arg0: i32, %arg1: i32) -> (i32, i32, i32) {
    %c0_i32 = arith.constant 0 : i32
    %c0_i32_0 = arith.constant 0 : i32
    %c0_i32_1 = arith.constant 0 : i32
    return %arg1, %c0_i32, %c0_i32_0 : i32, i32, i32
  }
  func.func @transform_4(%arg0: i32, %arg1: i32) -> (i32, i32, i32) {
    %c0_i32 = arith.constant 0 : i32
    %c0_i32_0 = arith.constant 0 : i32
    %c0_i32_1 = arith.constant 0 : i32
    return %arg1, %c0_i32, %c0_i32_0 : i32, i32, i32
  }
  func.func @transform_5(%arg0: i32, %arg1: i32) -> (i32, i32) {
    %c0_i32 = arith.constant 0 : i32
    %c0_i32_0 = arith.constant 0 : i32
    %c0_i32_1 = arith.constant 0 : i32
    return %c0_i32, %c0_i32_0 : i32, i32
  }
  func.func @transform_6(%arg0: i32, %arg1: i32) -> (i32, i32) {
    %c0_i32 = arith.constant 0 : i32
    %c0_i32_0 = arith.constant 0 : i32
    %c0_i32_1 = arith.constant 0 : i32
    return %c0_i32, %c0_i32_0 : i32, i32
  }
  func.func @transform_7(%arg0: i32, %arg1: i32) -> (i32, i32) {
    %c0_i32 = arith.constant 0 : i32
    %c0_i32_0 = arith.constant 0 : i32
    %c0_i32_1 = arith.constant 0 : i32
    return %c0_i32, %c0_i32_0 : i32, i32
  }
  func.func @transform_8(%arg0: i32, %arg1: i32) -> (i32, i32, i32) {
    %c0_i32 = arith.constant 0 : i32
    %c0_i32_0 = arith.constant 0 : i32
    %c0_i32_1 = arith.constant 0 : i32
    return %arg0, %c0_i32, %c0_i32_0 : i32, i32, i32
  }
}

</mosaic_0001>

<llo_original>
// kernel: decoder_only_forward.1
$region0: #{decoder_only_forward.1}
  #allocation0 [shape = 'u32[]', space=smem, size = 0x4, offset = 0x4, fixed_abs, tag = 'smem constant byte address 0x4 - core index']
  #allocation1 [shape = 'u32[144,128]{1,0:T(1,128)}', space=vmem, size = 0x12000, scoped, tag = 'internal scratch']
  #allocation2 [shape = 'f32[16,64]{1,0:T(8,128)}', space=vmem, size = 0x2000, scoped, tag = 'scratch operand']
  %s0 = inlined_call_operand.vmem [shape: f32[2,8,64], index: 0, kind: input, shape index: {}]
  %s1 = inlined_call_operand.vmem [shape: bf16[2,64,192], index: 1, kind: input, shape index: {}]
  %s2 = inlined_call_operand.vmem [shape: f32[2,1,192], index: 2, kind: input, shape index: {}]
  %s3 = inlined_call_operand.vmem [shape: bf16[2,64,64], index: 3, kind: input, shape index: {}]
  %s4 = inlined_call_operand.vmem [shape: f32[2,1,64], index: 4, kind: input, shape index: {}]
  %s5 = inlined_call_operand.vmem [shape: f32[8,8], index: 5, kind: input, shape index: {}]
  %s6 = inlined_call_operand.vmem [shape: bf16[64,128], index: 6, kind: input, shape index: {}]
  %s7 = inlined_call_operand.vmem [shape: f32[1,128], index: 7, kind: input, shape index: {}]
  %s8 = inlined_call_operand.vmem [shape: f32[2,8,128], index: 8, kind: output, shape index: {}]
  %s9 = sld [smem:[#allocation0]]
  $region73: #{decoder_only_forward.1} parent=0
    _
  %s11 = ssub.s32 1, %s9
  %s12 = scalar_select 0, %s11, %s9
  loop: start=0, step=1, limit=4
  $region2: #{decoder_only_forward.1} parent=0 // loop_pre_header
    _
  $region3: #{decoder_only_forward.1} parent=0 // loop_header
    %s14 = sphi 0, %s18
    %p15 = scmp.ge.s32.totalorder %s14, 4
    %s21 = sphi 0, %s33
    %s22 = sphi 0, %s29
    %s23 = sphi 0, %s21
    %s24 = sphi 0, %s22
    %s25 = sphi 0, %s23
    %s26 = sphi 0, %s24
    %s36 = sphi 0, %s38
    %s39 = sphi 0, %s36
    %s40 = sphi 0, %s39
    %s56 = sphi 0, %s40
    %s62 = sphi 0, %s64
    %s65 = sphi 0, %s62
    %s66 = sphi 0, %s65
    %s82 = sphi 0, %s66
    %s88 = sphi 0, %s90
    %s91 = sphi 0, %s88
    %s92 = sphi 0, %s91
    %s108 = sphi 0, %s92
    %s114 = sphi 0, %s116
    %s117 = sphi 0, %s114
    %s118 = sphi 0, %s117
    %s134 = sphi 0, %s118
    %s140 = sphi 0, %s142
    %s143 = sphi 0, %s140
    %s144 = sphi 0, %s143
    %s160 = sphi 0, %s144
    %s164 = sphi 0, %s164
    %s166 = sphi 0, %s164
    %s167 = sphi 0, %s166
    %s181 = sphi 0, %s167
    %s185 = sphi 0, %s185
    %s187 = sphi 0, %s185
    %s188 = sphi 0, %s187
    %s202 = sphi 0, %s188
    %s206 = sphi 0, %s206
    %s208 = sphi 0, %s206
    %s209 = sphi 0, %s208
    %s223 = sphi 0, %s209
    %s229 = sphi 0, %s231
    %s232 = sphi 0, %s229
    %s233 = sphi 0, %s232
    %s249 = sphi 0, %s233
  $region4: #{decoder_only_forward.1} parent=0 // loop_header_branch
    %17 = sbr.rel (%p15) target = $region8
  $region5: #{decoder_only_forward.1} parent=0 // loop_body
    %s19 = ssub.s32 %s14, 1
    %s20 = ssub.s32 %s14, 2
    %s27 = sadd.s32 1, %s22
    %p28 = scmp.ge.s32.totalorder %s27, 2
    %s29 = scalar_select %p28, 0, %s27
    %s30 = sadd.s32 1, %s21
    %s31 = scalar_select %p28, %s30, %s21
    %p32 = scmp.ge.s32.totalorder %s31, 1
    %s33 = scalar_select %p32, 0, %s31
    %s34 = ssub.s32 %s21, %s33
    %p35 = scmp.eq.s32.totalorder %s34, 0
    %s37 = sadd.s32 %s36, 1
    %s38 = scalar_select %p35, %s36, %s37
    %p41 = pneg %p35
    %p42 = scmp.eq.s32.totalorder %s14, 1
    %p43 = por %p41, %p42
    %p44 = scmp.ne.s32.totalorder %s36, %s39
    %p45 = scmp.eq.s32.totalorder %s14, 0
    %p46 = por %p44, %p45
    %p47 = scmp.ne.s32.totalorder %s36, %s39
    %p48 = scmp.eq.s32.totalorder %s19, 1
    %p49 = por %p47, %p48
    %p50 = scmp.ne.s32.totalorder %s39, %s40
    %p51 = scmp.eq.s32.totalorder %s19, 0
    %p52 = por %p50, %p51
    %p53 = scmp.ne.s32.totalorder %s39, %s40
    %p54 = scmp.eq.s32.totalorder %s20, 1
    %p55 = por %p53, %p54
    %p57 = scmp.ne.s32.totalorder %s40, %s56
    %p58 = scmp.eq.s32.totalorder %s20, 0
    %p59 = por %p57, %p58
    %s60 = ssub.s32 %s22, %s29
    %p61 = scmp.eq.s32.totalorder %s60, 0
    %s63 = sadd.s32 %s62, 1
    %s64 = scalar_select %p61, %s62, %s63
    %p67 = pneg %p61
    %p68 = scmp.eq.s32.totalorder %s14, 1
    %p69 = por %p67, %p68
    %p70 = scmp.ne.s32.totalorder %s62, %s65
    %p71 = scmp.eq.s32.totalorder %s14, 0
    %p72 = por %p70, %p71
    %p73 = scmp.ne.s32.totalorder %s62, %s65
    %p74 = scmp.eq.s32.totalorder %s19, 1
    %p75 = por %p73, %p74
    %p76 = scmp.ne.s32.totalorder %s65, %s66
    %p77 = scmp.eq.s32.totalorder %s19, 0
    %p78 = por %p76, %p77
    %p79 = scmp.ne.s32.totalorder %s65, %s66
    %p80 = scmp.eq.s32.totalorder %s20, 1
    %p81 = por %p79, %p80
    %p83 = scmp.ne.s32.totalorder %s66, %s82
    %p84 = scmp.eq.s32.totalorder %s20, 0
    %p85 = por %p83, %p84
    %s86 = ssub.s32 %s22, %s29
    %p87 = scmp.eq.s32.totalorder %s86, 0
    %s89 = sadd.s32 %s88, 1
    %s90 = scalar_select %p87, %s88, %s89
    %p93 = pneg %p87
    %p94 = scmp.eq.s32.totalorder %s14, 1
    %p95 = por %p93, %p94
    %p96 = scmp.ne.s32.totalorder %s88, %s91
    %p97 = scmp.eq.s32.totalorder %s14, 0
    %p98 = por %p96, %p97
    %p99 = scmp.ne.s32.totalorder %s88, %s91
    %p100 = scmp.eq.s32.totalorder %s19, 1
    %p101 = por %p99, %p100
    %p102 = scmp.ne.s32.totalorder %s91, %s92
    %p103 = scmp.eq.s32.totalorder %s19, 0
    %p104 = por %p102, %p103
    %p105 = scmp.ne.s32.totalorder %s91, %s92
    %p106 = scmp.eq.s32.totalorder %s20, 1
    %p107 = por %p105, %p106
    %p109 = scmp.ne.s32.totalorder %s92, %s108
    %p110 = scmp.eq.s32.totalorder %s20, 0
    %p111 = por %p109, %p110
    %s112 = ssub.s32 %s22, %s29
    %p113 = scmp.eq.s32.totalorder %s112, 0
    %s115 = sadd.s32 %s114, 1
    %s116 = scalar_select %p113, %s114, %s115
    %p119 = pneg %p113
    %p120 = scmp.eq.s32.totalorder %s14, 1
    %p121 = por %p119, %p120
    %p122 = scmp.ne.s32.totalorder %s114, %s117
    %p123 = scmp.eq.s32.totalorder %s14, 0
    %p124 = por %p122, %p123
    %p125 = scmp.ne.s32.totalorder %s114, %s117
    %p126 = scmp.eq.s32.totalorder %s19, 1
    %p127 = por %p125, %p126
    %p128 = scmp.ne.s32.totalorder %s117, %s118
    %p129 = scmp.eq.s32.totalorder %s19, 0
    %p130 = por %p128, %p129
    %p131 = scmp.ne.s32.totalorder %s117, %s118
    %p132 = scmp.eq.s32.totalorder %s20, 1
    %p133 = por %p131, %p132
    %p135 = scmp.ne.s32.totalorder %s118, %s134
    %p136 = scmp.eq.s32.totalorder %s20, 0
    %p137 = por %p135, %p136
    %s138 = ssub.s32 %s22, %s29
    %p139 = scmp.eq.s32.totalorder %s138, 0
    %s141 = sadd.s32 %s140, 1
    %s142 = scalar_select %p139, %s140, %s141
    %p145 = pneg %p139
    %p146 = scmp.eq.s32.totalorder %s14, 1
    %p147 = por %p145, %p146
    %p148 = scmp.ne.s32.totalorder %s140, %s143
    %p149 = scmp.eq.s32.totalorder %s14, 0
    %p150 = por %p148, %p149
    %p151 = scmp.ne.s32.totalorder %s140, %s143
    %p152 = scmp.eq.s32.totalorder %s19, 1
    %p153 = por %p151, %p152
    %p154 = scmp.ne.s32.totalorder %s143, %s144
    %p155 = scmp.eq.s32.totalorder %s19, 0
    %p156 = por %p154, %p155
    %p157 = scmp.ne.s32.totalorder %s143, %s144
    %p158 = scmp.eq.s32.totalorder %s20, 1
    %p159 = por %p157, %p158
    %p161 = scmp.ne.s32.totalorder %s144, %s160
    %p162 = scmp.eq.s32.totalorder %s20, 0
    %p163 = por %p161, %p162
    %s165 = sadd.s32 %s164, 1
    %p168 = scmp.eq.s32.totalorder %s14, 1
    %p169 = scmp.ne.s32.totalorder %s164, %s166
    %p170 = scmp.eq.s32.totalorder %s14, 0
    %p171 = por %p169, %p170
    %p172 = scmp.ne.s32.totalorder %s164, %s166
    %p173 = scmp.eq.s32.totalorder %s19, 1
    %p174 = por %p172, %p173
    %p175 = scmp.ne.s32.totalorder %s166, %s167
    %p176 = scmp.eq.s32.totalorder %s19, 0
    %p177 = por %p175, %p176
    %p178 = scmp.ne.s32.totalorder %s166, %s167
    %p179 = scmp.eq.s32.totalorder %s20, 1
    %p180 = por %p178, %p179
    %p182 = scmp.ne.s32.totalorder %s167, %s181
    %p183 = scmp.eq.s32.totalorder %s20, 0
    %p184 = por %p182, %p183
    %s186 = sadd.s32 %s185, 1
    %p189 = scmp.eq.s32.totalorder %s14, 1
    %p190 = scmp.ne.s32.totalorder %s185, %s187
    %p191 = scmp.eq.s32.totalorder %s14, 0
    %p192 = por %p190, %p191
    %p193 = scmp.ne.s32.totalorder %s185, %s187
    %p194 = scmp.eq.s32.totalorder %s19, 1
    %p195 = por %p193, %p194
    %p196 = scmp.ne.s32.totalorder %s187, %s188
    %p197 = scmp.eq.s32.totalorder %s19, 0
    %p198 = por %p196, %p197
    %p199 = scmp.ne.s32.totalorder %s187, %s188
    %p200 = scmp.eq.s32.totalorder %s20, 1
    %p201 = por %p199, %p200
    %p203 = scmp.ne.s32.totalorder %s188, %s202
    %p204 = scmp.eq.s32.totalorder %s20, 0
    %p205 = por %p203, %p204
    %s207 = sadd.s32 %s206, 1
    %p210 = scmp.eq.s32.totalorder %s14, 1
    %p211 = scmp.ne.s32.totalorder %s206, %s208
    %p212 = scmp.eq.s32.totalorder %s14, 0
    %p213 = por %p211, %p212
    %p214 = scmp.ne.s32.totalorder %s206, %s208
    %p215 = scmp.eq.s32.totalorder %s19, 1
    %p216 = por %p214, %p215
    %p217 = scmp.ne.s32.totalorder %s208, %s209
    %p218 = scmp.eq.s32.totalorder %s19, 0
    %p219 = por %p217, %p218
    %p220 = scmp.ne.s32.totalorder %s208, %s209
    %p221 = scmp.eq.s32.totalorder %s20, 1
    %p222 = por %p220, %p221
    %p224 = scmp.ne.s32.totalorder %s209, %s223
    %p225 = scmp.eq.s32.totalorder %s20, 0
    %p226 = por %p224, %p225
    %s227 = ssub.s32 %s21, %s33
    %p228 = scmp.eq.s32.totalorder %s227, 0
    %s230 = sadd.s32 %s229, 1
    %s231 = scalar_select %p228, %s229, %s230
    %p234 = pneg %p228
    %p235 = scmp.eq.s32.totalorder %s14, 1
    %p236 = por %p234, %p235
    %p237 = scmp.ne.s32.totalorder %s229, %s232
    %p238 = scmp.eq.s32.totalorder %s14, 0
    %p239 = por %p237, %p238
    %p240 = scmp.ne.s32.totalorder %s229, %s232
    %p241 = scmp.eq.s32.totalorder %s19, 1
    %p242 = por %p240, %p241
    %p243 = scmp.ne.s32.totalorder %s232, %s233
    %p244 = scmp.eq.s32.totalorder %s19, 0
    %p245 = por %p243, %p244
    %p246 = scmp.ne.s32.totalorder %s232, %s233
    %p247 = scmp.eq.s32.totalorder %s20, 1
    %p248 = por %p246, %p247
    %p250 = scmp.ne.s32.totalorder %s233, %s249
    %p251 = scmp.eq.s32.totalorder %s20, 0
    %p252 = por %p250, %p251
    %p253 = scmp.le.s32.totalorder 1, %s14
    %p254 = scmp.lt.s32.totalorder %s14, 3
    %p255 = pnand %p253, %p254
    %p256 = pneg %p255
    // Predicated region
    $region9: #{decoder_only_forward.1} parent=5 // pred_check
      _
    $region10: #{decoder_only_forward.1} parent=5 // pred_check_branch
      %258 = sbr.rel (%p255) target = $region12
    $region11: #{decoder_only_forward.1} parent=5 // pred_region
      %s259 = ssub.s32 %s14, 1
      // Predicated region
      $region13: #{decoder_only_forward.1} parent=11 // pred_check
        %p260 = pneg %p52
      $region14: #{decoder_only_forward.1} parent=11 // pred_check_branch
        %262 = sbr.rel (%p260) target = $region16
      $region15: #{decoder_only_forward.1} parent=11 // pred_region
        %s263 = smul.u32 2, %s23
        %p264 = scmp.lt.s32.totalorder %s263, 1
        %s265 = scalar_select %p264, %s263, 1
        %s266 = smul.addr %s265, 8
        %s267 = scalar_lea.vmem %s0, %s266
        %s268 = smul.u32 2, %s23
      $region16: #{decoder_only_forward.1} parent=11 // pred_fallthru
        _
      // Predicated region
      $region17: #{decoder_only_forward.1} parent=11 // pred_check
        %p269 = pneg %p177
      $region18: #{decoder_only_forward.1} parent=11 // pred_check_branch
        %271 = sbr.rel (%p269) target = $region20
      $region19: #{decoder_only_forward.1} parent=11 // pred_region
        _
      $region20: #{decoder_only_forward.1} parent=11 // pred_fallthru
        _
      // Predicated region
      $region21: #{decoder_only_forward.1} parent=11 // pred_check
        %p272 = pneg %p198
      $region22: #{decoder_only_forward.1} parent=11 // pred_check_branch
        %274 = sbr.rel (%p272) target = $region24
      $region23: #{decoder_only_forward.1} parent=11 // pred_region
        _
      $region24: #{decoder_only_forward.1} parent=11 // pred_fallthru
        _
      // Predicated region
      $region25: #{decoder_only_forward.1} parent=11 // pred_check
        %p275 = pneg %p219
      $region26: #{decoder_only_forward.1} parent=11 // pred_check_branch
        %277 = sbr.rel (%p275) target = $region28
      $region27: #{decoder_only_forward.1} parent=11 // pred_region
        _
      $region28: #{decoder_only_forward.1} parent=11 // pred_fallthru
        _
    $region12: #{decoder_only_forward.1} parent=5 // pred_fallthru
      _
    %p278 = scmp.lt.s32.totalorder %s14, 2
    // Predicated region
    $region29: #{decoder_only_forward.1} parent=5 // pred_check
      %p279 = pneg %p278
    $region30: #{decoder_only_forward.1} parent=5 // pred_check_branch
      %281 = sbr.rel (%p279) target = $region32
    $region31: #{decoder_only_forward.1} parent=5 // pred_region
      // Predicated region
      $region33: #{decoder_only_forward.1} parent=31 // pred_check
        %p282 = pneg %p72
      $region34: #{decoder_only_forward.1} parent=31 // pred_check_branch
        %284 = sbr.rel (%p282) target = $region36
      $region35: #{decoder_only_forward.1} parent=31 // pred_region
        %p285 = scmp.lt.s32.totalorder %s22, 1
        %s286 = scalar_select %p285, %s22, 1
        %s287 = smul.addr %s286, 16
        %s288 = smul.addr %s287, 4
        %s289 = scalar_lea.vmem %s1, %s288
      $region36: #{decoder_only_forward.1} parent=31 // pred_fallthru
        _
      // Predicated region
      $region37: #{decoder_only_forward.1} parent=31 // pred_check
        %p290 = pneg %p98
      $region38: #{decoder_only_forward.1} parent=31 // pred_check_branch
        %292 = sbr.rel (%p290) target = $region40
      $region39: #{decoder_only_forward.1} parent=31 // pred_region
        %p293 = scmp.lt.s32.totalorder %s22, 1
        %s294 = scalar_select %p293, %s22, 1
        %s295 = smul.addr %s294, 2
        %s296 = scalar_lea.vmem %s2, %s295
      $region40: #{decoder_only_forward.1} parent=31 // pred_fallthru
        _
      // Predicated region
      $region41: #{decoder_only_forward.1} parent=31 // pred_check
        %p297 = pneg %p124
      $region42: #{decoder_only_forward.1} parent=31 // pred_check_branch
        %299 = sbr.rel (%p297) target = $region44
      $region43: #{decoder_only_forward.1} parent=31 // pred_region
        %p300 = scmp.lt.s32.totalorder %s22, 1
        %s301 = scalar_select %p300, %s22, 1
        %s302 = smul.addr %s301, 8
        %s303 = smul.addr %s302, 4
        %s304 = scalar_lea.vmem %s3, %s303
      $region44: #{decoder_only_forward.1} parent=31 // pred_fallthru
        _
      // Predicated region
      $region45: #{decoder_only_forward.1} parent=31 // pred_check
        %p305 = pneg %p150
      $region46: #{decoder_only_forward.1} parent=31 // pred_check_branch
        %307 = sbr.rel (%p305) target = $region48
      $region47: #{decoder_only_forward.1} parent=31 // pred_region
        %p308 = scmp.lt.s32.totalorder %s22, 1
        %s309 = scalar_select %p308, %s22, 1
        %s310 = scalar_lea.vmem %s4, %s309
      $region48: #{decoder_only_forward.1} parent=31 // pred_fallthru
        _
    $region32: #{decoder_only_forward.1} parent=5 // pred_fallthru
      _
    %p311 = scmp.le.s32.totalorder 1, %s14
    %p312 = scmp.lt.s32.totalorder %s14, 3
    %p313 = pnand %p311, %p312
    %p314 = pneg %p313
    // Predicated region
    $region49: #{decoder_only_forward.1} parent=5 // pred_check
      _
    $region50: #{decoder_only_forward.1} parent=5 // pred_check_branch
      %316 = sbr.rel (%p313) target = $region52
    $region51: #{decoder_only_forward.1} parent=5 // pred_region
      %s317 = ssub.s32 %s14, 1
      %s318 = smul.u32 2, %s23
      %p319 = scmp.lt.s32.totalorder %s318, 1
      %s320 = scalar_select %p319, %s318, 1
      %s321 = smul.addr %s320, 8
      %s322 = scalar_lea.vmem %s0, %s321
      %p323 = pneg %p52
      %p324 = pneg %p49
      %p325 = scmp.lt.s32.totalorder %s24, 1
      %s326 = scalar_select %p325, %s24, 1
      %s327 = smul.addr %s326, 16
      %s328 = smul.addr %s327, 4
      %s329 = scalar_lea.vmem %s1, %s328
      %p330 = pneg %p78
      %p331 = pneg %p75
      %p332 = scmp.lt.s32.totalorder %s24, 1
      %s333 = scalar_select %p332, %s24, 1
      %s334 = smul.addr %s333, 2
      %s335 = scalar_lea.vmem %s2, %s334
      %p336 = pneg %p104
      %p337 = pneg %p101
      %p338 = scmp.lt.s32.totalorder %s24, 1
      %s339 = scalar_select %p338, %s24, 1
      %s340 = smul.addr %s339, 8
      %s341 = smul.addr %s340, 4
      %s342 = scalar_lea.vmem %s3, %s341
      %p343 = pneg %p130
      %p344 = pneg %p127
      %p345 = scmp.lt.s32.totalorder %s24, 1
      %s346 = scalar_select %p345, %s24, 1
      %s347 = scalar_lea.vmem %s4, %s346
      %p348 = pneg %p156
      %p349 = pneg %p153
      %p350 = pneg %p177
      %p351 = pneg %p174
      %p352 = pneg %p198
      %p353 = pneg %p195
      %p354 = pneg %p219
      %p355 = pneg %p216
      %p356 = pneg %p245
      %p357 = pneg %p242
      %s358 = smul.u32 2, %s23
      %p359 = scmp.lt.s32.totalorder %s358, 1
      %s360 = scalar_select %p359, %s358, 1
      %s361 = smul.addr %s360, 8
      %s362 = scalar_lea.vmem %s8, %s361
      %s363 = smul.u32 2, %s23
      %p364 = scmp.lt.s32.totalorder %s363, 1
      %s365 = scalar_select %p364, %s363, 1
      %s366 = smul.addr %s365, 8
      %s367 = scalar_lea.vmem %s0, %s366
      %s368 = smul.u32 2, %s23
      %p369 = scmp.lt.s32.totalorder %s24, 1
      %s370 = scalar_select %p369, %s24, 1
      %s371 = smul.addr %s370, 16
      %s372 = smul.addr %s371, 4
      %s373 = scalar_lea.vmem %s1, %s372
      %p374 = scmp.lt.s32.totalorder %s24, 1
      %s375 = scalar_select %p374, %s24, 1
      %s376 = smul.addr %s375, 2
      %s377 = scalar_lea.vmem %s2, %s376
      %p378 = scmp.lt.s32.totalorder %s24, 1
      %s379 = scalar_select %p378, %s24, 1
      %s380 = smul.addr %s379, 8
      %s381 = smul.addr %s380, 4
      %s382 = scalar_lea.vmem %s3, %s381
      %p383 = scmp.lt.s32.totalorder %s24, 1
      %s384 = scalar_select %p383, %s24, 1
      %s385 = scalar_lea.vmem %s4, %s384
      %s386 = smul.u32 2, %s23
      %p387 = scmp.lt.s32.totalorder %s386, 1
      %s388 = scalar_select %p387, %s386, 1
      %s389 = smul.addr %s388, 8
      %s390 = scalar_lea.vmem %s8, %s389
      %s391 = smul.u32 2, %s23
      %p393 = scmp.eq.s32.totalorder %s24, 0
      // Predicated region
      $region53: #{decoder_only_forward.1} parent=51 // pred_check
        %p394 = pneg %p393
      $region54: #{decoder_only_forward.1} parent=51 // pred_check_branch
        %396 = sbr.rel (%p394) target = $region56
      $region55: #{decoder_only_forward.1} parent=51 // pred_region
        %v397 = vld [vmem:[%s367] sm:$0xff]
        %v398 = vld [vmem:[%s367 + $0x8] sm:$0xff]
        %vm399 = vcmask 523264
        %400 = vst.msk [vmem:[#allocation2] sm:$0xff] %vm399, %v397
        %401 = vst.msk [vmem:[#allocation2 + $0x8] sm:$0xff] %vm399, %v398
      $region56: #{decoder_only_forward.1} parent=51 // pred_fallthru
        _
      %v402 = vld [vmem:[#allocation2] sm:$0xff]
      %v403 = vld [vmem:[#allocation2 + $0x8] sm:$0xff]
      %v404 = vpack.c.bf16 %v403, %v402
      %v405 = vld [vmem:[%s373] sm:$0xff]
      %v406 = vld [vmem:[%s373 + $0x8] sm:$0xff]
      %v407 = vld [vmem:[%s373 + $0x10] sm:$0xff]
      %v408 = vld [vmem:[%s373 + $0x18] sm:$0xff]
      %v409 = vld [vmem:[%s373 + $0x20] sm:$0xff]
      %v410 = vld [vmem:[%s373 + $0x28] sm:$0xff]
      %v411 = vld [vmem:[%s373 + $0x30] sm:$0xff]
      %v412 = vld [vmem:[%s373 + $0x38] sm:$0xff]
      %v413 = vld [vmem:[%s377] sm:$0x3]
      %v415 = vlaneseq
      %v416 = vshrl.u32 %v415, 7
      %v417 = vsub.s32 0, %v416
      %v418 = vrot.slane %v413, %v417
      %v419 = vlaneseq
      %v420 = vshrl.u32 %v419, 7
      %v421 = vsub.s32 1, %v420
      %v422 = vrot.slane %v413, %v421
      %v433 = vunpack.c.l.b16 %v405
      %v434 = vunpack.c.h.b16 %v405
      %v435 = vunpack.c.l.b16 %v406
      %v436 = vunpack.c.h.b16 %v406
      %v437 = vunpack.c.l.b16 %v407
      %v438 = vunpack.c.h.b16 %v407
      %v439 = vunpack.c.l.b16 %v408
      %v440 = vunpack.c.h.b16 %v408
      %v441 = vunpack.c.l.b16 %v409
      %v442 = vunpack.c.h.b16 %v409
      %v443 = vunpack.c.l.b16 %v410
      %v444 = vunpack.c.h.b16 %v410
      %v445 = vunpack.c.l.b16 %v411
      %v446 = vunpack.c.h.b16 %v411
      %v447 = vunpack.c.l.b16 %v412
      %v448 = vunpack.c.h.b16 %v412
      %v449 = vpack.c.b16 %v435, %v433
      %v450 = vpack.c.b16 %v436, %v434
      %v451 = vpack.c.b16 %v439, %v437
      %v452 = vpack.c.b16 %v440, %v438
      %v453 = vpack.c.b16 %v443, %v441
      %v454 = vpack.c.b16 %v444, %v442
      %v455 = vpack.c.b16 %v447, %v445
      %v456 = vpack.c.b16 %v448, %v446
      %vm465 = vcmask 523264
      %v467 = vsel %vm465, %v404, 0
      %469 = vmatprep.subr.bf16.mxu0 %v450
      %470 = vmatpush1.bf16.msra.mxu0 %v449
      %471 = vmatprep.subr.bf16.mxu0 %v452
      %472 = vmatpush1.bf16.msra.mxu0 %v451
      %473 = vmatprep.subr.bf16.mxu0 %v454
      %474 = vmatpush1.bf16.msra.mxu0 %v453
      %475 = vmatprep.subr.bf16.mxu0 %v456
      %476 = vmatpush1.bf16.msra.mxu0 %v455
      %477 = vmatprep.subr.bf16.mxu0 0
      %478 = vmatpush1.bf16.msra.mxu0 0
      %479 = vmatprep.subr.bf16.mxu0 0
      %480 = vmatpush1.bf16.msra.mxu0 0
      %481 = vmatprep.subr.bf16.mxu0 0
      %482 = vmatpush1.bf16.msra.mxu0 0
      %483 = vmatprep.subr.bf16.mxu0 0
      %484 = vmatpush1.bf16.msra.mxu0 0
      %485 = vmatprep.subr.bf16.mxu0 0
      %486 = vmatpush1.bf16.msra.mxu0 0
      %487 = vmatprep.subr.bf16.mxu0 0
      %488 = vmatpush1.bf16.msra.mxu0 0
      %489 = vmatprep.subr.bf16.mxu0 0
      %490 = vmatpush1.bf16.msra.mxu0 0
      %491 = vmatprep.subr.bf16.mxu0 0
      %492 = vmatpush1.bf16.msra.mxu0 0
      %493 = vmatprep.subr.bf16.mxu0 0
      %494 = vmatpush1.bf16.msra.mxu0 0
      %495 = vmatprep.subr.bf16.mxu0 0
      %496 = vmatpush1.bf16.msra.mxu0 0
      %497 = vmatprep.subr.bf16.mxu0 0
      %498 = vmatpush1.bf16.msra.mxu0 0
      %499 = vmatprep.subr.bf16.mxu0 0
      %500 = vmatpush1.bf16.msra.mxu0 0
      %501 = vmatprep.mubr.bf16.mxu0 0
      %502 = vmatmul.mubr.bf16.gmra.mrb[0].mxu0 %v467
      %v503 = vpop.f32.mrb[0].mxu0
      %v504 = vadd.f32 %v418, %v503
      %v505 = vpop.f32.mrb[0].mxu0
      %v506 = vadd.f32 %v422, %v505
      %v507 = vpop.f32.mrb[0].mxu0
      %v508 = vadd.f32 %v418, %v507
      %v509 = vpop.f32.mrb[0].mxu0
      %v510 = vadd.f32 %v422, %v509
      %511 = vdwg.mxu0
      %v512 = vpack.c.bf16 %v508, %v504
      %v513 = vpack.c.bf16 %v510, %v506
      %v516 = vunpack.c.l.b16 %v512
      %v517 = vunpack.c.l.b16 %v513
      %v518 = vunpack.c.h.b16 %v512
      %v519 = vunpack.c.h.b16 %v513
      %v520 = vpack.c.b16 %v517, %v516
      %v521 = vpack.c.b16 %v519, %v518
      %522 = vrot.lane.b32.xlu0 %v520, 112
      %v523 = vpop.permute.xlu0 %522
      %524 = vrot.lane.b32.xlu0 %v521, 112
      %v525 = vpop.permute.xlu0 %524
      %526 = vrot.lane.b32.xlu0 %v520, 96
      %v527 = vpop.permute.xlu0 %526
      %528 = vrot.lane.b32.xlu0 %v521, 96
      %v529 = vpop.permute.xlu0 %528
      %530 = vrot.lane.b32.xlu0 %v520, 80
      %v531 = vpop.permute.xlu0 %530
      %532 = vrot.lane.b32.xlu0 %v521, 80
      %v533 = vpop.permute.xlu0 %532
      %v534 = vrot.slane %v520, 4
      %v535 = vrot.slane %v521, 4
      %v536 = vrot.slane %v523, 4
      %v537 = vrot.slane %v525, 4
      %v538 = vrot.slane %v527, 4
      %v539 = vrot.slane %v529, 4
      %v540 = vrot.slane %v531, 4
      %v541 = vrot.slane %v533, 4
      %v542 = vld [vmem:[%s5] sm:$0xff]
      %v543 = vpack.c.b16 %v516, %v516
      %544 = vrot.lane.b32.xlu0 %v543, 64
      %v545 = vpop.permute.xlu0 %544
      %vm546 = vcmask 130048
      %v548 = vsel %vm546, %v520, 0
      %v551 = vsel %vm546, %v545, 0
      %553 = vmatprep.subr.bf16.mxu0 0
      %554 = vmatpush1.bf16.xpose.msra.mxu0 %v551
      %555 = vmatprep.subr.bf16.mxu0 0
      %556 = vmatpush1.bf16.xpose.msra.mxu0 0
      %557 = vmatprep.subr.bf16.mxu0 0
      %558 = vmatpush1.bf16.xpose.msra.mxu0 0
      %559 = vmatprep.subr.bf16.mxu0 0
      %560 = vmatpush1.bf16.xpose.msra.mxu0 0
      %561 = vmatprep.subr.bf16.mxu0 0
      %562 = vmatpush1.bf16.xpose.msra.mxu0 0
      %563 = vmatprep.subr.bf16.mxu0 0
      %564 = vmatpush1.bf16.xpose.msra.mxu0 0
      %565 = vmatprep.subr.bf16.mxu0 0
      %566 = vmatpush1.bf16.xpose.msra.mxu0 0
      %567 = vmatprep.subr.bf16.mxu0 0
      %568 = vmatpush1.bf16.xpose.msra.mxu0 0
      %569 = vmatprep.subr.bf16.mxu0 0
      %570 = vmatpush1.bf16.xpose.msra.mxu0 0
      %571 = vmatprep.subr.bf16.mxu0 0
      %572 = vmatpush1.bf16.xpose.msra.mxu0 0
      %573 = vmatprep.subr.bf16.mxu0 0
      %574 = vmatpush1.bf16.xpose.msra.mxu0 0
      %575 = vmatprep.subr.bf16.mxu0 0
      %576 = vmatpush1.bf16.xpose.msra.mxu0 0
      %577 = vmatprep.subr.bf16.mxu0 0
      %578 = vmatpush1.bf16.xpose.msra.mxu0 0
      %579 = vmatprep.subr.bf16.mxu0 0
      %580 = vmatpush1.bf16.xpose.msra.mxu0 0
      %581 = vmatprep.subr.bf16.mxu0 0
      %582 = vmatpush1.bf16.xpose.msra.mxu0 0
      %583 = vmatprep.subr.bf16.mxu0 0
      %584 = vmatpush1.bf16.xpose.msra.mxu0 0
      %585 = vmatprep.mubr.bf16.mxu0 0
      %586 = vmatmul.mubr.bf16.gmra.mrb[0].mxu0 %v548
      %v587 = vpop.f32.mrb[0].mxu0
      %v588 = vadd.f32 %v542, %v587
      %v589 = vpop.f32.mrb[0].mxu0
      %v590 = vpop.f32.mrb[0].mxu0
      %v591 = vpop.f32.mrb[0].mxu0
      %592 = vdwg.mxu0
      %v593 = vpack.c.b16 %v518, %v518
      %594 = vrot.lane.b32.xlu0 %v593, 64
      %v595 = vpop.permute.xlu0 %594
      %v597 = vsel %vm546, %v521, 0
      %v600 = vsel %vm546, %v595, 0
      %602 = vmatprep.subr.bf16.mxu0 0
      %603 = vmatpush1.bf16.xpose.msra.mxu0 %v600
      %604 = vmatprep.subr.bf16.mxu0 0
      %605 = vmatpush1.bf16.xpose.msra.mxu0 0
      %606 = vmatprep.subr.bf16.mxu0 0
      %607 = vmatpush1.bf16.xpose.msra.mxu0 0
      %608 = vmatprep.subr.bf16.mxu0 0
      %609 = vmatpush1.bf16.xpose.msra.mxu0 0
      %610 = vmatprep.subr.bf16.mxu0 0
      %611 = vmatpush1.bf16.xpose.msra.mxu0 0
      %612 = vmatprep.subr.bf16.mxu0 0
      %613 = vmatpush1.bf16.xpose.msra.mxu0 0
      %614 = vmatprep.subr.bf16.mxu0 0
      %615 = vmatpush1.bf16.xpose.msra.mxu0 0
      %616 = vmatprep.subr.bf16.mxu0 0
      %617 = vmatpush1.bf16.xpose.msra.mxu0 0
      %618 = vmatprep.subr.bf16.mxu0 0
      %619 = vmatpush1.bf16.xpose.msra.mxu0 0
      %620 = vmatprep.subr.bf16.mxu0 0
      %621 = vmatpush1.bf16.xpose.msra.mxu0 0
      %622 = vmatprep.subr.bf16.mxu0 0
      %623 = vmatpush1.bf16.xpose.msra.mxu0 0
      %624 = vmatprep.subr.bf16.mxu0 0
      %625 = vmatpush1.bf16.xpose.msra.mxu0 0
      %626 = vmatprep.subr.bf16.mxu0 0
      %627 = vmatpush1.bf16.xpose.msra.mxu0 0
      %628 = vmatprep.subr.bf16.mxu0 0
      %629 = vmatpush1.bf16.xpose.msra.mxu0 0
      %630 = vmatprep.subr.bf16.mxu0 0
      %631 = vmatpush1.bf16.xpose.msra.mxu0 0
      %632 = vmatprep.subr.bf16.mxu0 0
      %633 = vmatpush1.bf16.xpose.msra.mxu0 0
      %634 = vmatprep.mubr.bf16.mxu0 0
      %635 = vmatmul.mubr.bf16.gmra.mrb[0].mxu0 %v597
      %v636 = vpop.f32.mrb[0].mxu0
      %v637 = vadd.f32 %v542, %v636
      %v638 = vpop.f32.mrb[0].mxu0
      %v639 = vpop.f32.mrb[0].mxu0
      %v640 = vpop.f32.mrb[0].mxu0
      %641 = vdwg.mxu0
      %v642 = vunpack.c.l.b16 %v523
      %v643 = vpack.c.b16 %v642, %v642
      %644 = vrot.lane.b32.xlu0 %v643, 64
      %v645 = vpop.permute.xlu0 %644
      %v647 = vsel %vm546, %v523, 0
      %v650 = vsel %vm546, %v645, 0
      %652 = vmatprep.subr.bf16.mxu0 0
      %653 = vmatpush1.bf16.xpose.msra.mxu0 %v650
      %654 = vmatprep.subr.bf16.mxu0 0
      %655 = vmatpush1.bf16.xpose.msra.mxu0 0
      %656 = vmatprep.subr.bf16.mxu0 0
      %657 = vmatpush1.bf16.xpose.msra.mxu0 0
      %658 = vmatprep.subr.bf16.mxu0 0
      %659 = vmatpush1.bf16.xpose.msra.mxu0 0
      %660 = vmatprep.subr.bf16.mxu0 0
      %661 = vmatpush1.bf16.xpose.msra.mxu0 0
      %662 = vmatprep.subr.bf16.mxu0 0
      %663 = vmatpush1.bf16.xpose.msra.mxu0 0
      %664 = vmatprep.subr.bf16.mxu0 0
      %665 = vmatpush1.bf16.xpose.msra.mxu0 0
      %666 = vmatprep.subr.bf16.mxu0 0
      %667 = vmatpush1.bf16.xpose.msra.mxu0 0
      %668 = vmatprep.subr.bf16.mxu0 0
      %669 = vmatpush1.bf16.xpose.msra.mxu0 0
      %670 = vmatprep.subr.bf16.mxu0 0
      %671 = vmatpush1.bf16.xpose.msra.mxu0 0
      %672 = vmatprep.subr.bf16.mxu0 0
      %673 = vmatpush1.bf16.xpose.msra.mxu0 0
      %674 = vmatprep.subr.bf16.mxu0 0
      %675 = vmatpush1.bf16.xpose.msra.mxu0 0
      %676 = vmatprep.subr.bf16.mxu0 0
      %677 = vmatpush1.bf16.xpose.msra.mxu0 0
      %678 = vmatprep.subr.bf16.mxu0 0
      %679 = vmatpush1.bf16.xpose.msra.mxu0 0
      %680 = vmatprep.subr.bf16.mxu0 0
      %681 = vmatpush1.bf16.xpose.msra.mxu0 0
      %682 = vmatprep.subr.bf16.mxu0 0
      %683 = vmatpush1.bf16.xpose.msra.mxu0 0
      %684 = vmatprep.mubr.bf16.mxu0 0
      %685 = vmatmul.mubr.bf16.gmra.mrb[0].mxu0 %v647
      %v686 = vpop.f32.mrb[0].mxu0
      %v687 = vadd.f32 %v542, %v686
      %v688 = vpop.f32.mrb[0].mxu0
      %v689 = vpop.f32.mrb[0].mxu0
      %v690 = vpop.f32.mrb[0].mxu0
      %691 = vdwg.mxu0
      %v692 = vunpack.c.l.b16 %v525
      %v693 = vpack.c.b16 %v692, %v692
      %694 = vrot.lane.b32.xlu0 %v693, 64
      %v695 = vpop.permute.xlu0 %694
      %v697 = vsel %vm546, %v525, 0
      %v700 = vsel %vm546, %v695, 0
      %702 = vmatprep.subr.bf16.mxu0 0
      %703 = vmatpush1.bf16.xpose.msra.mxu0 %v700
      %704 = vmatprep.subr.bf16.mxu0 0
      %705 = vmatpush1.bf16.xpose.msra.mxu0 0
      %706 = vmatprep.subr.bf16.mxu0 0
      %707 = vmatpush1.bf16.xpose.msra.mxu0 0
      %708 = vmatprep.subr.bf16.mxu0 0
      %709 = vmatpush1.bf16.xpose.msra.mxu0 0
      %710 = vmatprep.subr.bf16.mxu0 0
      %711 = vmatpush1.bf16.xpose.msra.mxu0 0
      %712 = vmatprep.subr.bf16.mxu0 0
      %713 = vmatpush1.bf16.xpose.msra.mxu0 0
      %714 = vmatprep.subr.bf16.mxu0 0
      %715 = vmatpush1.bf16.xpose.msra.mxu0 0
      %716 = vmatprep.subr.bf16.mxu0 0
      %717 = vmatpush1.bf16.xpose.msra.mxu0 0
      %718 = vmatprep.subr.bf16.mxu0 0
      %719 = vmatpush1.bf16.xpose.msra.mxu0 0
      %720 = vmatprep.subr.bf16.mxu0 0
      %721 = vmatpush1.bf16.xpose.msra.mxu0 0
      %722 = vmatprep.subr.bf16.mxu0 0
      %723 = vmatpush1.bf16.xpose.msra.mxu0 0
      %724 = vmatprep.subr.bf16.mxu0 0
      %725 = vmatpush1.bf16.xpose.msra.mxu0 0
      %726 = vmatprep.subr.bf16.mxu0 0
      %727 = vmatpush1.bf16.xpose.msra.mxu0 0
      %728 = vmatprep.subr.bf16.mxu0 0
      %729 = vmatpush1.bf16.xpose.msra.mxu0 0
      %730 = vmatprep.subr.bf16.mxu0 0
      %731 = vmatpush1.bf16.xpose.msra.mxu0 0
      %732 = vmatprep.subr.bf16.mxu0 0
      %733 = vmatpush1.bf16.xpose.msra.mxu0 0
      %734 = vmatprep.mubr.bf16.mxu0 0
      %735 = vmatmul.mubr.bf16.gmra.mrb[0].mxu0 %v697
      %v736 = vpop.f32.mrb[0].mxu0
      %v737 = vadd.f32 %v542, %v736
      %v738 = vpop.f32.mrb[0].mxu0
      %v739 = vpop.f32.mrb[0].mxu0
      %v740 = vpop.f32.mrb[0].mxu0
      %741 = vdwg.mxu0
      %v742 = vunpack.c.l.b16 %v527
      %v743 = vpack.c.b16 %v742, %v742
      %744 = vrot.lane.b32.xlu0 %v743, 64
      %v745 = vpop.permute.xlu0 %744
      %v747 = vsel %vm546, %v527, 0
      %v750 = vsel %vm546, %v745, 0
      %752 = vmatprep.subr.bf16.mxu0 0
      %753 = vmatpush1.bf16.xpose.msra.mxu0 %v750
      %754 = vmatprep.subr.bf16.mxu0 0
      %755 = vmatpush1.bf16.xpose.msra.mxu0 0
      %756 = vmatprep.subr.bf16.mxu0 0
      %757 = vmatpush1.bf16.xpose.msra.mxu0 0
      %758 = vmatprep.subr.bf16.mxu0 0
      %759 = vmatpush1.bf16.xpose.msra.mxu0 0
      %760 = vmatprep.subr.bf16.mxu0 0
      %761 = vmatpush1.bf16.xpose.msra.mxu0 0
      %762 = vmatprep.subr.bf16.mxu0 0
      %763 = vmatpush1.bf16.xpose.msra.mxu0 0
      %764 = vmatprep.subr.bf16.mxu0 0
      %765 = vmatpush1.bf16.xpose.msra.mxu0 0
      %766 = vmatprep.subr.bf16.mxu0 0
      %767 = vmatpush1.bf16.xpose.msra.mxu0 0
      %768 = vmatprep.subr.bf16.mxu0 0
      %769 = vmatpush1.bf16.xpose.msra.mxu0 0
      %770 = vmatprep.subr.bf16.mxu0 0
      %771 = vmatpush1.bf16.xpose.msra.mxu0 0
      %772 = vmatprep.subr.bf16.mxu0 0
      %773 = vmatpush1.bf16.xpose.msra.mxu0 0
      %774 = vmatprep.subr.bf16.mxu0 0
      %775 = vmatpush1.bf16.xpose.msra.mxu0 0
      %776 = vmatprep.subr.bf16.mxu0 0
      %777 = vmatpush1.bf16.xpose.msra.mxu0 0
      %778 = vmatprep.subr.bf16.mxu0 0
      %779 = vmatpush1.bf16.xpose.msra.mxu0 0
      %780 = vmatprep.subr.bf16.mxu0 0
      %781 = vmatpush1.bf16.xpose.msra.mxu0 0
      %782 = vmatprep.subr.bf16.mxu0 0
      %783 = vmatpush1.bf16.xpose.msra.mxu0 0
      %784 = vmatprep.mubr.bf16.mxu0 0
      %785 = vmatmul.mubr.bf16.gmra.mrb[0].mxu0 %v747
      %v786 = vpop.f32.mrb[0].mxu0
      %v787 = vadd.f32 %v542, %v786
      %v788 = vpop.f32.mrb[0].mxu0
      %v789 = vpop.f32.mrb[0].mxu0
      %v790 = vpop.f32.mrb[0].mxu0
      %791 = vdwg.mxu0
      %v792 = vunpack.c.l.b16 %v529
      %v793 = vpack.c.b16 %v792, %v792
      %794 = vrot.lane.b32.xlu0 %v793, 64
      %v795 = vpop.permute.xlu0 %794
      %v797 = vsel %vm546, %v529, 0
      %v800 = vsel %vm546, %v795, 0
      %802 = vmatprep.subr.bf16.mxu0 0
      %803 = vmatpush1.bf16.xpose.msra.mxu0 %v800
      %804 = vmatprep.subr.bf16.mxu0 0
      %805 = vmatpush1.bf16.xpose.msra.mxu0 0
      %806 = vmatprep.subr.bf16.mxu0 0
      %807 = vmatpush1.bf16.xpose.msra.mxu0 0
      %808 = vmatprep.subr.bf16.mxu0 0
      %809 = vmatpush1.bf16.xpose.msra.mxu0 0
      %810 = vmatprep.subr.bf16.mxu0 0
      %811 = vmatpush1.bf16.xpose.msra.mxu0 0
      %812 = vmatprep.subr.bf16.mxu0 0
      %813 = vmatpush1.bf16.xpose.msra.mxu0 0
      %814 = vmatprep.subr.bf16.mxu0 0
      %815 = vmatpush1.bf16.xpose.msra.mxu0 0
      %816 = vmatprep.subr.bf16.mxu0 0
      %817 = vmatpush1.bf16.xpose.msra.mxu0 0
      %818 = vmatprep.subr.bf16.mxu0 0
      %819 = vmatpush1.bf16.xpose.msra.mxu0 0
      %820 = vmatprep.subr.bf16.mxu0 0
      %821 = vmatpush1.bf16.xpose.msra.mxu0 0
      %822 = vmatprep.subr.bf16.mxu0 0
      %823 = vmatpush1.bf16.xpose.msra.mxu0 0
      %824 = vmatprep.subr.bf16.mxu0 0
      %825 = vmatpush1.bf16.xpose.msra.mxu0 0
      %826 = vmatprep.subr.bf16.mxu0 0
      %827 = vmatpush1.bf16.xpose.msra.mxu0 0
      %828 = vmatprep.subr.bf16.mxu0 0
      %829 = vmatpush1.bf16.xpose.msra.mxu0 0
      %830 = vmatprep.subr.bf16.mxu0 0
      %831 = vmatpush1.bf16.xpose.msra.mxu0 0
      %832 = vmatprep.subr.bf16.mxu0 0
      %833 = vmatpush1.bf16.xpose.msra.mxu0 0
      %834 = vmatprep.mubr.bf16.mxu0 0
      %835 = vmatmul.mubr.bf16.gmra.mrb[0].mxu0 %v797
      %v836 = vpop.f32.mrb[0].mxu0
      %v837 = vadd.f32 %v542, %v836
      %v838 = vpop.f32.mrb[0].mxu0
      %v839 = vpop.f32.mrb[0].mxu0
      %v840 = vpop.f32.mrb[0].mxu0
      %841 = vdwg.mxu0
      %v842 = vunpack.c.l.b16 %v531
      %v843 = vpack.c.b16 %v842, %v842
      %844 = vrot.lane.b32.xlu0 %v843, 64
      %v845 = vpop.permute.xlu0 %844
      %v847 = vsel %vm546, %v531, 0
      %v850 = vsel %vm546, %v845, 0
      %852 = vmatprep.subr.bf16.mxu0 0
      %853 = vmatpush1.bf16.xpose.msra.mxu0 %v850
      %854 = vmatprep.subr.bf16.mxu0 0
      %855 = vmatpush1.bf16.xpose.msra.mxu0 0
      %856 = vmatprep.subr.bf16.mxu0 0
      %857 = vmatpush1.bf16.xpose.msra.mxu0 0
      %858 = vmatprep.subr.bf16.mxu0 0
      %859 = vmatpush1.bf16.xpose.msra.mxu0 0
      %860 = vmatprep.subr.bf16.mxu0 0
      %861 = vmatpush1.bf16.xpose.msra.mxu0 0
      %862 = vmatprep.subr.bf16.mxu0 0
      %863 = vmatpush1.bf16.xpose.msra.mxu0 0
      %864 = vmatprep.subr.bf16.mxu0 0
      %865 = vmatpush1.bf16.xpose.msra.mxu0 0
      %866 = vmatprep.subr.bf16.mxu0 0
      %867 = vmatpush1.bf16.xpose.msra.mxu0 0
      %868 = vmatprep.subr.bf16.mxu0 0
      %869 = vmatpush1.bf16.xpose.msra.mxu0 0
      %870 = vmatprep.subr.bf16.mxu0 0
      %871 = vmatpush1.bf16.xpose.msra.mxu0 0
      %872 = vmatprep.subr.bf16.mxu0 0
      %873 = vmatpush1.bf16.xpose.msra.mxu0 0
      %874 = vmatprep.subr.bf16.mxu0 0
      %875 = vmatpush1.bf16.xpose.msra.mxu0 0
      %876 = vmatprep.subr.bf16.mxu0 0
      %877 = vmatpush1.bf16.xpose.msra.mxu0 0
      %878 = vmatprep.subr.bf16.mxu0 0
      %879 = vmatpush1.bf16.xpose.msra.mxu0 0
      %880 = vmatprep.subr.bf16.mxu0 0
      %881 = vmatpush1.bf16.xpose.msra.mxu0 0
      %882 = vmatprep.subr.bf16.mxu0 0
      %883 = vmatpush1.bf16.xpose.msra.mxu0 0
      %884 = vmatprep.mubr.bf16.mxu0 0
      %885 = vmatmul.mubr.bf16.gmra.mrb[0].mxu0 %v847
      %v886 = vpop.f32.mrb[0].mxu0
      %v887 = vadd.f32 %v542, %v886
      %v888 = vpop.f32.mrb[0].mxu0
      %v889 = vpop.f32.mrb[0].mxu0
      %v890 = vpop.f32.mrb[0].mxu0
      %891 = vdwg.mxu0
      %v892 = vunpack.c.l.b16 %v533
      %v893 = vpack.c.b16 %v892, %v892
      %894 = vrot.lane.b32.xlu0 %v893, 64
      %v895 = vpop.permute.xlu0 %894
      %v897 = vsel %vm546, %v533, 0
      %v900 = vsel %vm546, %v895, 0
      %902 = vmatprep.subr.bf16.mxu0 0
      %903 = vmatpush1.bf16.xpose.msra.mxu0 %v900
      %904 = vmatprep.subr.bf16.mxu0 0
      %905 = vmatpush1.bf16.xpose.msra.mxu0 0
      %906 = vmatprep.subr.bf16.mxu0 0
      %907 = vmatpush1.bf16.xpose.msra.mxu0 0
      %908 = vmatprep.subr.bf16.mxu0 0
      %909 = vmatpush1.bf16.xpose.msra.mxu0 0
      %910 = vmatprep.subr.bf16.mxu0 0
      %911 = vmatpush1.bf16.xpose.msra.mxu0 0
      %912 = vmatprep.subr.bf16.mxu0 0
      %913 = vmatpush1.bf16.xpose.msra.mxu0 0
      %914 = vmatprep.subr.bf16.mxu0 0
      %915 = vmatpush1.bf16.xpose.msra.mxu0 0
      %916 = vmatprep.subr.bf16.mxu0 0
      %917 = vmatpush1.bf16.xpose.msra.mxu0 0
      %918 = vmatprep.subr.bf16.mxu0 0
      %919 = vmatpush1.bf16.xpose.msra.mxu0 0
      %920 = vmatprep.subr.bf16.mxu0 0
      %921 = vmatpush1.bf16.xpose.msra.mxu0 0
      %922 = vmatprep.subr.bf16.mxu0 0
      %923 = vmatpush1.bf16.xpose.msra.mxu0 0
      %924 = vmatprep.subr.bf16.mxu0 0
      %925 = vmatpush1.bf16.xpose.msra.mxu0 0
      %926 = vmatprep.subr.bf16.mxu0 0
      %927 = vmatpush1.bf16.xpose.msra.mxu0 0
      %928 = vmatprep.subr.bf16.mxu0 0
      %929 = vmatpush1.bf16.xpose.msra.mxu0 0
      %930 = vmatprep.subr.bf16.mxu0 0
      %931 = vmatpush1.bf16.xpose.msra.mxu0 0
      %932 = vmatprep.subr.bf16.mxu0 0
      %933 = vmatpush1.bf16.xpose.msra.mxu0 0
      %934 = vmatprep.mubr.bf16.mxu0 0
      %935 = vmatmul.mubr.bf16.gmra.mrb[0].mxu0 %v897
      %v936 = vpop.f32.mrb[0].mxu0
      %v937 = vadd.f32 %v542, %v936
      %v938 = vpop.f32.mrb[0].mxu0
      %v939 = vpop.f32.mrb[0].mxu0
      %v940 = vpop.f32.mrb[0].mxu0
      %941 = vdwg.mxu0
      %vm942 = vcmask 64512
      %v943 = vsel %vm942, %v588, -inf
      %944 = vmax.xlane.f32.xlu0 %v943
      %v945 = vpop.xlane.xlu0 %944
      %v946 = vsel %vm942, %v637, -inf
      %947 = vmax.xlane.f32.xlu0 %v946
      %v948 = vpop.xlane.xlu0 %947
      %v949 = vsel %vm942, %v687, -inf
      %950 = vmax.xlane.f32.xlu0 %v949
      %v951 = vpop.xlane.xlu0 %950
      %v952 = vsel %vm942, %v737, -inf
      %953 = vmax.xlane.f32.xlu0 %v952
      %v954 = vpop.xlane.xlu0 %953
      %v955 = vsel %vm942, %v787, -inf
      %956 = vmax.xlane.f32.xlu0 %v955
      %v957 = vpop.xlane.xlu0 %956
      %v958 = vsel %vm942, %v837, -inf
      %959 = vmax.xlane.f32.xlu0 %v958
      %v960 = vpop.xlane.xlu0 %959
      %v961 = vsel %vm942, %v887, -inf
      %962 = vmax.xlane.f32.xlu0 %v961
      %v963 = vpop.xlane.xlu0 %962
      %v964 = vsel %vm942, %v937, -inf
      %965 = vmax.xlane.f32.xlu0 %v964
      %v966 = vpop.xlane.xlu0 %965
      %v967 = vsub.f32 %v588, %v945
      %v968 = vsub.f32 %v637, %v948
      %v969 = vsub.f32 %v687, %v951
      %v970 = vsub.f32 %v737, %v954
      %v971 = vsub.f32 %v787, %v957
      %v972 = vsub.f32 %v837, %v960
      %v973 = vsub.f32 %v887, %v963
      %v974 = vsub.f32 %v937, %v966
      %v975 = vmul.f32 %v967, 1.442695
      %v976 = vpow.pop %v975
      %v977 = vmul.f32 %v968, 1.442695
      %v978 = vpow.pop %v977
      %v979 = vmul.f32 %v969, 1.442695
      %v980 = vpow.pop %v979
      %v981 = vmul.f32 %v970, 1.442695
      %v982 = vpow.pop %v981
      %v983 = vmul.f32 %v971, 1.442695
      %v984 = vpow.pop %v983
      %v985 = vmul.f32 %v972, 1.442695
      %v986 = vpow.pop %v985
      %v987 = vmul.f32 %v973, 1.442695
      %v988 = vpow.pop %v987
      %v989 = vmul.f32 %v974, 1.442695
      %v990 = vpow.pop %v989
      %v991 = vsel %vm942, %v976, 0.0
      %992 = vadd.xlane.f32.xlu0 %v991
      %v993 = vpop.xlane.xlu0 %992
      %v994 = vsel %vm942, %v978, 0.0
      %995 = vadd.xlane.f32.xlu0 %v994
      %v996 = vpop.xlane.xlu0 %995
      %v997 = vsel %vm942, %v980, 0.0
      %998 = vadd.xlane.f32.xlu0 %v997
      %v999 = vpop.xlane.xlu0 %998
      %v1000 = vsel %vm942, %v982, 0.0
      %1001 = vadd.xlane.f32.xlu0 %v1000
      %v1002 = vpop.xlane.xlu0 %1001
      %v1003 = vsel %vm942, %v984, 0.0
      %1004 = vadd.xlane.f32.xlu0 %v1003
      %v1005 = vpop.xlane.xlu0 %1004
      %v1006 = vsel %vm942, %v986, 0.0
      %1007 = vadd.xlane.f32.xlu0 %v1006
      %v1008 = vpop.xlane.xlu0 %1007
      %v1009 = vsel %vm942, %v988, 0.0
      %1010 = vadd.xlane.f32.xlu0 %v1009
      %v1011 = vpop.xlane.xlu0 %1010
      %v1012 = vsel %vm942, %v990, 0.0
      %1013 = vadd.xlane.f32.xlu0 %v1012
      %v1014 = vpop.xlane.xlu0 %1013
      %v1015 = vrcp.pop %v993
      %v1016 = vrcp.pop %v996
      %v1017 = vrcp.pop %v999
      %v1018 = vrcp.pop %v1002
      %v1019 = vrcp.pop %v1005
      %v1020 = vrcp.pop %v1008
      %v1021 = vrcp.pop %v1011
      %v1022 = vrcp.pop %v1014
      %v1023 = vmul.f32 %v976, %v1015
      %v1024 = vmul.f32 %v978, %v1016
      %v1025 = vmul.f32 %v980, %v1017
      %v1026 = vmul.f32 %v982, %v1018
      %v1027 = vmul.f32 %v984, %v1019
      %v1028 = vmul.f32 %v986, %v1020
      %v1029 = vmul.f32 %v988, %v1021
      %v1030 = vmul.f32 %v990, %v1022
      %v1031 = vpack.c.bf16 %v1023, %v1023
      %v1032 = vpack.c.bf16 %v1024, %v1024
      %v1033 = vpack.c.bf16 %v1025, %v1025
      %v1034 = vpack.c.bf16 %v1026, %v1026
      %v1035 = vpack.c.bf16 %v1027, %v1027
      %v1036 = vpack.c.bf16 %v1028, %v1028
      %v1037 = vpack.c.bf16 %v1029, %v1029
      %v1038 = vpack.c.bf16 %v1030, %v1030
      %v1040 = vsel %vm942, %v1031, 0
      %vm1042 = vcmask 1043456
      %v1044 = vsel %vm1042, %v534, 0
      %1046 = vmatprep.subr.bf16.mxu0 0
      %1047 = vmatpush1.bf16.msra.mxu0 %v1044
      %1048 = vmatprep.subr.bf16.mxu0 0
      %1049 = vmatpush1.bf16.msra.mxu0 0
      %1050 = vmatprep.subr.bf16.mxu0 0
      %1051 = vmatpush1.bf16.msra.mxu0 0
      %1052 = vmatprep.subr.bf16.mxu0 0
      %1053 = vmatpush1.bf16.msra.mxu0 0
      %1054 = vmatprep.subr.bf16.mxu0 0
      %1055 = vmatpush1.bf16.msra.mxu0 0
      %1056 = vmatprep.subr.bf16.mxu0 0
      %1057 = vmatpush1.bf16.msra.mxu0 0
      %1058 = vmatprep.subr.bf16.mxu0 0
      %1059 = vmatpush1.bf16.msra.mxu0 0
      %1060 = vmatprep.subr.bf16.mxu0 0
      %1061 = vmatpush1.bf16.msra.mxu0 0
      %1062 = vmatprep.subr.bf16.mxu0 0
      %1063 = vmatpush1.bf16.msra.mxu0 0
      %1064 = vmatprep.subr.bf16.mxu0 0
      %1065 = vmatpush1.bf16.msra.mxu0 0
      %1066 = vmatprep.subr.bf16.mxu0 0
      %1067 = vmatpush1.bf16.msra.mxu0 0
      %1068 = vmatprep.subr.bf16.mxu0 0
      %1069 = vmatpush1.bf16.msra.mxu0 0
      %1070 = vmatprep.subr.bf16.mxu0 0
      %1071 = vmatpush1.bf16.msra.mxu0 0
      %1072 = vmatprep.subr.bf16.mxu0 0
      %1073 = vmatpush1.bf16.msra.mxu0 0
      %1074 = vmatprep.subr.bf16.mxu0 0
      %1075 = vmatpush1.bf16.msra.mxu0 0
      %1076 = vmatprep.subr.bf16.mxu0 0
      %1077 = vmatpush1.bf16.msra.mxu0 0
      %1078 = vmatprep.mubr.bf16.mxu0 0
      %1079 = vmatmul.mubr.bf16.gmra.mrb[0].mxu0 %v1040
      %v1080 = vpop.f32.mrb[0].mxu0
      %v1081 = vadd.f32 0.0, %v1080
      %v1082 = vpop.f32.mrb[0].mxu0
      %v1083 = vpop.f32.mrb[0].mxu0
      %v1084 = vpop.f32.mrb[0].mxu0
      %1085 = vdwg.mxu0
      %v1087 = vsel %vm942, %v1032, 0
      %v1090 = vsel %vm1042, %v535, 0
      %1092 = vmatprep.subr.bf16.mxu0 0
      %1093 = vmatpush1.bf16.msra.mxu0 %v1090
      %1094 = vmatprep.subr.bf16.mxu0 0
      %1095 = vmatpush1.bf16.msra.mxu0 0
      %1096 = vmatprep.subr.bf16.mxu0 0
      %1097 = vmatpush1.bf16.msra.mxu0 0
      %1098 = vmatprep.subr.bf16.mxu0 0
      %1099 = vmatpush1.bf16.msra.mxu0 0
      %1100 = vmatprep.subr.bf16.mxu0 0
      %1101 = vmatpush1.bf16.msra.mxu0 0
      %1102 = vmatprep.subr.bf16.mxu0 0
      %1103 = vmatpush1.bf16.msra.mxu0 0
      %1104 = vmatprep.subr.bf16.mxu0 0
      %1105 = vmatpush1.bf16.msra.mxu0 0
      %1106 = vmatprep.subr.bf16.mxu0 0
      %1107 = vmatpush1.bf16.msra.mxu0 0
      %1108 = vmatprep.subr.bf16.mxu0 0
      %1109 = vmatpush1.bf16.msra.mxu0 0
      %1110 = vmatprep.subr.bf16.mxu0 0
      %1111 = vmatpush1.bf16.msra.mxu0 0
      %1112 = vmatprep.subr.bf16.mxu0 0
      %1113 = vmatpush1.bf16.msra.mxu0 0
      %1114 = vmatprep.subr.bf16.mxu0 0
      %1115 = vmatpush1.bf16.msra.mxu0 0
      %1116 = vmatprep.subr.bf16.mxu0 0
      %1117 = vmatpush1.bf16.msra.mxu0 0
      %1118 = vmatprep.subr.bf16.mxu0 0
      %1119 = vmatpush1.bf16.msra.mxu0 0
      %1120 = vmatprep.subr.bf16.mxu0 0
      %1121 = vmatpush1.bf16.msra.mxu0 0
      %1122 = vmatprep.subr.bf16.mxu0 0
      %1123 = vmatpush1.bf16.msra.mxu0 0
      %1124 = vmatprep.mubr.bf16.mxu0 0
      %1125 = vmatmul.mubr.bf16.gmra.mrb[0].mxu0 %v1087
      %v1126 = vpop.f32.mrb[0].mxu0
      %v1127 = vadd.f32 0.0, %v1126
      %v1128 = vpop.f32.mrb[0].mxu0
      %v1129 = vpop.f32.mrb[0].mxu0
      %v1130 = vpop.f32.mrb[0].mxu0
      %1131 = vdwg.mxu0
      %v1133 = vsel %vm942, %v1033, 0
      %v1136 = vsel %vm1042, %v536, 0
      %1138 = vmatprep.subr.bf16.mxu0 0
      %1139 = vmatpush1.bf16.msra.mxu0 %v1136
      %1140 = vmatprep.subr.bf16.mxu0 0
      %1141 = vmatpush1.bf16.msra.mxu0 0
      %1142 = vmatprep.subr.bf16.mxu0 0
      %1143 = vmatpush1.bf16.msra.mxu0 0
      %1144 = vmatprep.subr.bf16.mxu0 0
      %1145 = vmatpush1.bf16.msra.mxu0 0
      %1146 = vmatprep.subr.bf16.mxu0 0
      %1147 = vmatpush1.bf16.msra.mxu0 0
      %1148 = vmatprep.subr.bf16.mxu0 0
      %1149 = vmatpush1.bf16.msra.mxu0 0
      %1150 = vmatprep.subr.bf16.mxu0 0
      %1151 = vmatpush1.bf16.msra.mxu0 0
      %1152 = vmatprep.subr.bf16.mxu0 0
      %1153 = vmatpush1.bf16.msra.mxu0 0
      %1154 = vmatprep.subr.bf16.mxu0 0
      %1155 = vmatpush1.bf16.msra.mxu0 0
      %1156 = vmatprep.subr.bf16.mxu0 0
      %1157 = vmatpush1.bf16.msra.mxu0 0
      %1158 = vmatprep.subr.bf16.mxu0 0
      %1159 = vmatpush1.bf16.msra.mxu0 0
      %1160 = vmatprep.subr.bf16.mxu0 0
      %1161 = vmatpush1.bf16.msra.mxu0 0
      %1162 = vmatprep.subr.bf16.mxu0 0
      %1163 = vmatpush1.bf16.msra.mxu0 0
      %1164 = vmatprep.subr.bf16.mxu0 0
      %1165 = vmatpush1.bf16.msra.mxu0 0
      %1166 = vmatprep.subr.bf16.mxu0 0
      %1167 = vmatpush1.bf16.msra.mxu0 0
      %1168 = vmatprep.subr.bf16.mxu0 0
      %1169 = vmatpush1.bf16.msra.mxu0 0
      %1170 = vmatprep.mubr.bf16.mxu0 0
      %1171 = vmatmul.mubr.bf16.gmra.mrb[0].mxu0 %v1133
      %v1172 = vpop.f32.mrb[0].mxu0
      %v1173 = vadd.f32 0.0, %v1172
      %v1174 = vpop.f32.mrb[0].mxu0
      %v1175 = vpop.f32.mrb[0].mxu0
      %v1176 = vpop.f32.mrb[0].mxu0
      %1177 = vdwg.mxu0
      %v1179 = vsel %vm942, %v1034, 0
      %v1182 = vsel %vm1042, %v537, 0
      %1184 = vmatprep.subr.bf16.mxu0 0
      %1185 = vmatpush1.bf16.msra.mxu0 %v1182
      %1186 = vmatprep.subr.bf16.mxu0 0
      %1187 = vmatpush1.bf16.msra.mxu0 0
      %1188 = vmatprep.subr.bf16.mxu0 0
      %1189 = vmatpush1.bf16.msra.mxu0 0
      %1190 = vmatprep.subr.bf16.mxu0 0
      %1191 = vmatpush1.bf16.msra.mxu0 0
      %1192 = vmatprep.subr.bf16.mxu0 0
      %1193 = vmatpush1.bf16.msra.mxu0 0
      %1194 = vmatprep.subr.bf16.mxu0 0
      %1195 = vmatpush1.bf16.msra.mxu0 0
      %1196 = vmatprep.subr.bf16.mxu0 0
      %1197 = vmatpush1.bf16.msra.mxu0 0
      %1198 = vmatprep.subr.bf16.mxu0 0
      %1199 = vmatpush1.bf16.msra.mxu0 0
      %1200 = vmatprep.subr.bf16.mxu0 0
      %1201 = vmatpush1.bf16.msra.mxu0 0
      %1202 = vmatprep.subr.bf16.mxu0 0
      %1203 = vmatpush1.bf16.msra.mxu0 0
      %1204 = vmatprep.subr.bf16.mxu0 0
      %1205 = vmatpush1.bf16.msra.mxu0 0
      %1206 = vmatprep.subr.bf16.mxu0 0
      %1207 = vmatpush1.bf16.msra.mxu0 0
      %1208 = vmatprep.subr.bf16.mxu0 0
      %1209 = vmatpush1.bf16.msra.mxu0 0
      %1210 = vmatprep.subr.bf16.mxu0 0
      %1211 = vmatpush1.bf16.msra.mxu0 0
      %1212 = vmatprep.subr.bf16.mxu0 0
      %1213 = vmatpush1.bf16.msra.mxu0 0
      %1214 = vmatprep.subr.bf16.mxu0 0
      %1215 = vmatpush1.bf16.msra.mxu0 0
      %1216 = vmatprep.mubr.bf16.mxu0 0
      %1217 = vmatmul.mubr.bf16.gmra.mrb[0].mxu0 %v1179
      %v1218 = vpop.f32.mrb[0].mxu0
      %v1219 = vadd.f32 0.0, %v1218
      %v1220 = vpop.f32.mrb[0].mxu0
      %v1221 = vpop.f32.mrb[0].mxu0
      %v1222 = vpop.f32.mrb[0].mxu0
      %1223 = vdwg.mxu0
      %v1225 = vsel %vm942, %v1035, 0
      %v1228 = vsel %vm1042, %v538, 0
      %1230 = vmatprep.subr.bf16.mxu0 0
      %1231 = vmatpush1.bf16.msra.mxu0 %v1228
      %1232 = vmatprep.subr.bf16.mxu0 0
      %1233 = vmatpush1.bf16.msra.mxu0 0
      %1234 = vmatprep.subr.bf16.mxu0 0
      %1235 = vmatpush1.bf16.msra.mxu0 0
      %1236 = vmatprep.subr.bf16.mxu0 0
      %1237 = vmatpush1.bf16.msra.mxu0 0
      %1238 = vmatprep.subr.bf16.mxu0 0
      %1239 = vmatpush1.bf16.msra.mxu0 0
      %1240 = vmatprep.subr.bf16.mxu0 0
      %1241 = vmatpush1.bf16.msra.mxu0 0
      %1242 = vmatprep.subr.bf16.mxu0 0
      %1243 = vmatpush1.bf16.msra.mxu0 0
      %1244 = vmatprep.subr.bf16.mxu0 0
      %1245 = vmatpush1.bf16.msra.mxu0 0
      %1246 = vmatprep.subr.bf16.mxu0 0
      %1247 = vmatpush1.bf16.msra.mxu0 0
      %1248 = vmatprep.subr.bf16.mxu0 0
      %1249 = vmatpush1.bf16.msra.mxu0 0
      %1250 = vmatprep.subr.bf16.mxu0 0
      %1251 = vmatpush1.bf16.msra.mxu0 0
      %1252 = vmatprep.subr.bf16.mxu0 0
      %1253 = vmatpush1.bf16.msra.mxu0 0
      %1254 = vmatprep.subr.bf16.mxu0 0
      %1255 = vmatpush1.bf16.msra.mxu0 0
      %1256 = vmatprep.subr.bf16.mxu0 0
      %1257 = vmatpush1.bf16.msra.mxu0 0
      %1258 = vmatprep.subr.bf16.mxu0 0
      %1259 = vmatpush1.bf16.msra.mxu0 0
      %1260 = vmatprep.subr.bf16.mxu0 0
      %1261 = vmatpush1.bf16.msra.mxu0 0
      %1262 = vmatprep.mubr.bf16.mxu0 0
      %1263 = vmatmul.mubr.bf16.gmra.mrb[0].mxu0 %v1225
      %v1264 = vpop.f32.mrb[0].mxu0
      %v1265 = vadd.f32 0.0, %v1264
      %v1266 = vpop.f32.mrb[0].mxu0
      %v1267 = vpop.f32.mrb[0].mxu0
      %v1268 = vpop.f32.mrb[0].mxu0
      %1269 = vdwg.mxu0
      %v1271 = vsel %vm942, %v1036, 0
      %v1274 = vsel %vm1042, %v539, 0
      %1276 = vmatprep.subr.bf16.mxu0 0
      %1277 = vmatpush1.bf16.msra.mxu0 %v1274
      %1278 = vmatprep.subr.bf16.mxu0 0
      %1279 = vmatpush1.bf16.msra.mxu0 0
      %1280 = vmatprep.subr.bf16.mxu0 0
      %1281 = vmatpush1.bf16.msra.mxu0 0
      %1282 = vmatprep.subr.bf16.mxu0 0
      %1283 = vmatpush1.bf16.msra.mxu0 0
      %1284 = vmatprep.subr.bf16.mxu0 0
      %1285 = vmatpush1.bf16.msra.mxu0 0
      %1286 = vmatprep.subr.bf16.mxu0 0
      %1287 = vmatpush1.bf16.msra.mxu0 0
      %1288 = vmatprep.subr.bf16.mxu0 0
      %1289 = vmatpush1.bf16.msra.mxu0 0
      %1290 = vmatprep.subr.bf16.mxu0 0
      %1291 = vmatpush1.bf16.msra.mxu0 0
      %1292 = vmatprep.subr.bf16.mxu0 0
      %1293 = vmatpush1.bf16.msra.mxu0 0
      %1294 = vmatprep.subr.bf16.mxu0 0
      %1295 = vmatpush1.bf16.msra.mxu0 0
      %1296 = vmatprep.subr.bf16.mxu0 0
      %1297 = vmatpush1.bf16.msra.mxu0 0
      %1298 = vmatprep.subr.bf16.mxu0 0
      %1299 = vmatpush1.bf16.msra.mxu0 0
      %1300 = vmatprep.subr.bf16.mxu0 0
      %1301 = vmatpush1.bf16.msra.mxu0 0
      %1302 = vmatprep.subr.bf16.mxu0 0
      %1303 = vmatpush1.bf16.msra.mxu0 0
      %1304 = vmatprep.subr.bf16.mxu0 0
      %1305 = vmatpush1.bf16.msra.mxu0 0
      %1306 = vmatprep.subr.bf16.mxu0 0
      %1307 = vmatpush1.bf16.msra.mxu0 0
      %1308 = vmatprep.mubr.bf16.mxu0 0
      %1309 = vmatmul.mubr.bf16.gmra.mrb[0].mxu0 %v1271
      %v1310 = vpop.f32.mrb[0].mxu0
      %v1311 = vadd.f32 0.0, %v1310
      %v1312 = vpop.f32.mrb[0].mxu0
      %v1313 = vpop.f32.mrb[0].mxu0
      %v1314 = vpop.f32.mrb[0].mxu0
      %1315 = vdwg.mxu0
      %v1317 = vsel %vm942, %v1037, 0
      %v1320 = vsel %vm1042, %v540, 0
      %1322 = vmatprep.subr.bf16.mxu0 0
      %1323 = vmatpush1.bf16.msra.mxu0 %v1320
      %1324 = vmatprep.subr.bf16.mxu0 0
      %1325 = vmatpush1.bf16.msra.mxu0 0
      %1326 = vmatprep.subr.bf16.mxu0 0
      %1327 = vmatpush1.bf16.msra.mxu0 0
      %1328 = vmatprep.subr.bf16.mxu0 0
      %1329 = vmatpush1.bf16.msra.mxu0 0
      %1330 = vmatprep.subr.bf16.mxu0 0
      %1331 = vmatpush1.bf16.msra.mxu0 0
      %1332 = vmatprep.subr.bf16.mxu0 0
      %1333 = vmatpush1.bf16.msra.mxu0 0
      %1334 = vmatprep.subr.bf16.mxu0 0
      %1335 = vmatpush1.bf16.msra.mxu0 0
      %1336 = vmatprep.subr.bf16.mxu0 0
      %1337 = vmatpush1.bf16.msra.mxu0 0
      %1338 = vmatprep.subr.bf16.mxu0 0
      %1339 = vmatpush1.bf16.msra.mxu0 0
      %1340 = vmatprep.subr.bf16.mxu0 0
      %1341 = vmatpush1.bf16.msra.mxu0 0
      %1342 = vmatprep.subr.bf16.mxu0 0
      %1343 = vmatpush1.bf16.msra.mxu0 0
      %1344 = vmatprep.subr.bf16.mxu0 0
      %1345 = vmatpush1.bf16.msra.mxu0 0
      %1346 = vmatprep.subr.bf16.mxu0 0
      %1347 = vmatpush1.bf16.msra.mxu0 0
      %1348 = vmatprep.subr.bf16.mxu0 0
      %1349 = vmatpush1.bf16.msra.mxu0 0
      %1350 = vmatprep.subr.bf16.mxu0 0
      %1351 = vmatpush1.bf16.msra.mxu0 0
      %1352 = vmatprep.subr.bf16.mxu0 0
      %1353 = vmatpush1.bf16.msra.mxu0 0
      %1354 = vmatprep.mubr.bf16.mxu0 0
      %1355 = vmatmul.mubr.bf16.gmra.mrb[0].mxu0 %v1317
      %v1356 = vpop.f32.mrb[0].mxu0
      %v1357 = vadd.f32 0.0, %v1356
      %v1358 = vpop.f32.mrb[0].mxu0
      %v1359 = vpop.f32.mrb[0].mxu0
      %v1360 = vpop.f32.mrb[0].mxu0
      %1361 = vdwg.mxu0
      %v1363 = vsel %vm942, %v1038, 0
      %v1366 = vsel %vm1042, %v541, 0
      %1368 = vmatprep.subr.bf16.mxu0 0
      %1369 = vmatpush1.bf16.msra.mxu0 %v1366
      %1370 = vmatprep.subr.bf16.mxu0 0
      %1371 = vmatpush1.bf16.msra.mxu0 0
      %1372 = vmatprep.subr.bf16.mxu0 0
      %1373 = vmatpush1.bf16.msra.mxu0 0
      %1374 = vmatprep.subr.bf16.mxu0 0
      %1375 = vmatpush1.bf16.msra.mxu0 0
      %1376 = vmatprep.subr.bf16.mxu0 0
      %1377 = vmatpush1.bf16.msra.mxu0 0
      %1378 = vmatprep.subr.bf16.mxu0 0
      %1379 = vmatpush1.bf16.msra.mxu0 0
      %1380 = vmatprep.subr.bf16.mxu0 0
      %1381 = vmatpush1.bf16.msra.mxu0 0
      %1382 = vmatprep.subr.bf16.mxu0 0
      %1383 = vmatpush1.bf16.msra.mxu0 0
      %1384 = vmatprep.subr.bf16.mxu0 0
      %1385 = vmatpush1.bf16.msra.mxu0 0
      %1386 = vmatprep.subr.bf16.mxu0 0
      %1387 = vmatpush1.bf16.msra.mxu0 0
      %1388 = vmatprep.subr.bf16.mxu0 0
      %1389 = vmatpush1.bf16.msra.mxu0 0
      %1390 = vmatprep.subr.bf16.mxu0 0
      %1391 = vmatpush1.bf16.msra.mxu0 0
      %1392 = vmatprep.subr.bf16.mxu0 0
      %1393 = vmatpush1.bf16.msra.mxu0 0
      %1394 = vmatprep.subr.bf16.mxu0 0
      %1395 = vmatpush1.bf16.msra.mxu0 0
      %1396 = vmatprep.subr.bf16.mxu0 0
      %1397 = vmatpush1.bf16.msra.mxu0 0
      %1398 = vmatprep.subr.bf16.mxu0 0
      %1399 = vmatpush1.bf16.msra.mxu0 0
      %1400 = vmatprep.mubr.bf16.mxu0 0
      %1401 = vmatmul.mubr.bf16.gmra.mrb[0].mxu0 %v1363
      %v1402 = vpop.f32.mrb[0].mxu0
      %v1403 = vadd.f32 0.0, %v1402
      %v1404 = vpop.f32.mrb[0].mxu0
      %v1405 = vpop.f32.mrb[0].mxu0
      %v1406 = vpop.f32.mrb[0].mxu0
      %1407 = vdwg.mxu0
      %1410 = vrot.lane.b32.xlu0 %v1173, 16
      %v1411 = vpop.permute.xlu0 %1410
      %1412 = vrot.lane.b32.xlu0 %v1219, 16
      %v1413 = vpop.permute.xlu0 %1412
      %1418 = vrot.lane.b32.xlu0 %v1265, 32
      %v1419 = vpop.permute.xlu0 %1418
      %1420 = vrot.lane.b32.xlu0 %v1311, 32
      %v1421 = vpop.permute.xlu0 %1420
      %1426 = vrot.lane.b32.xlu0 %v1357, 48
      %v1427 = vpop.permute.xlu0 %1426
      %1428 = vrot.lane.b32.xlu0 %v1403, 48
      %v1429 = vpop.permute.xlu0 %1428
      %v1432 = vsel %vm546, %v1081, %v1411
      %v1433 = vsel %vm546, %v1127, %v1413
      %vm1434 = vcmask 261120
      %v1435 = vsel %vm1434, %v1432, %v1419
      %v1436 = vsel %vm1434, %v1433, %v1421
      %vm1437 = vcmask 392192
      %v1438 = vsel %vm1437, %v1435, %v1427
      %v1439 = vsel %vm1437, %v1436, %v1429
      %v1440 = vpack.c.bf16 %v1439, %v1438
      %v1441 = vld [vmem:[%s382] sm:$0xf]
      %v1442 = vld [vmem:[%s382 + $0x4] sm:$0xf]
      %v1443 = vld [vmem:[%s382 + $0x8] sm:$0xf]
      %v1444 = vld [vmem:[%s382 + $0xc] sm:$0xf]
      %v1445 = vld [vmem:[%s382 + $0x10] sm:$0xf]
      %v1446 = vld [vmem:[%s382 + $0x14] sm:$0xf]
      %v1447 = vld [vmem:[%s382 + $0x18] sm:$0xf]
      %v1448 = vld [vmem:[%s382 + $0x1c] sm:$0xf]
      %v1449 = vld [vmem:[%s385] sm:$0x1]
      %v1451 = vlaneseq
      %v1452 = vshrl.u32 %v1451, 7
      %v1453 = vsub.s32 0, %v1452
      %v1454 = vrot.slane %v1449, %v1453
      %v1464 = vunpack.c.l.b16 %v1441
      %v1465 = vunpack.c.l.b16 %v1442
      %v1466 = vunpack.c.l.b16 %v1443
      %v1467 = vunpack.c.l.b16 %v1444
      %v1468 = vunpack.c.l.b16 %v1445
      %v1469 = vunpack.c.l.b16 %v1446
      %v1470 = vunpack.c.l.b16 %v1447
      %v1471 = vunpack.c.l.b16 %v1448
      %v1472 = vpack.c.b16 %v1465, %v1464
      %v1473 = vpack.c.b16 %v1467, %v1466
      %v1474 = vpack.c.b16 %v1469, %v1468
      %v1475 = vpack.c.b16 %v1471, %v1470
      %v1481 = vsel %vm465, %v1440, 0
      %1483 = vmatprep.subr.bf16.mxu0 0
      %1484 = vmatpush1.bf16.msra.mxu0 %v1472
      %1485 = vmatprep.subr.bf16.mxu0 0
      %1486 = vmatpush1.bf16.msra.mxu0 %v1473
      %1487 = vmatprep.subr.bf16.mxu0 0
      %1488 = vmatpush1.bf16.msra.mxu0 %v1474
      %1489 = vmatprep.subr.bf16.mxu0 0
      %1490 = vmatpush1.bf16.msra.mxu0 %v1475
      %1491 = vmatprep.subr.bf16.mxu0 0
      %1492 = vmatpush1.bf16.msra.mxu0 0
      %1493 = vmatprep.subr.bf16.mxu0 0
      %1494 = vmatpush1.bf16.msra.mxu0 0
      %1495 = vmatprep.subr.bf16.mxu0 0
      %1496 = vmatpush1.bf16.msra.mxu0 0
      %1497 = vmatprep.subr.bf16.mxu0 0
      %1498 = vmatpush1.bf16.msra.mxu0 0
      %1499 = vmatprep.subr.bf16.mxu0 0
      %1500 = vmatpush1.bf16.msra.mxu0 0
      %1501 = vmatprep.subr.bf16.mxu0 0
      %1502 = vmatpush1.bf16.msra.mxu0 0
      %1503 = vmatprep.subr.bf16.mxu0 0
      %1504 = vmatpush1.bf16.msra.mxu0 0
      %1505 = vmatprep.subr.bf16.mxu0 0
      %1506 = vmatpush1.bf16.msra.mxu0 0
      %1507 = vmatprep.subr.bf16.mxu0 0
      %1508 = vmatpush1.bf16.msra.mxu0 0
      %1509 = vmatprep.subr.bf16.mxu0 0
      %1510 = vmatpush1.bf16.msra.mxu0 0
      %1511 = vmatprep.subr.bf16.mxu0 0
      %1512 = vmatpush1.bf16.msra.mxu0 0
      %1513 = vmatprep.subr.bf16.mxu0 0
      %1514 = vmatpush1.bf16.msra.mxu0 0
      %1515 = vmatprep.mubr.bf16.mxu0 0
      %1516 = vmatmul.mubr.bf16.gmra.mrb[0].mxu0 %v1481
      %v1517 = vpop.f32.mrb[0].mxu0
      %v1518 = vadd.f32 %v1454, %v1517
      %v1519 = vpop.f32.mrb[0].mxu0
      %v1520 = vpop.f32.mrb[0].mxu0
      %v1521 = vadd.f32 %v1454, %v1520
      %v1522 = vpop.f32.mrb[0].mxu0
      %1523 = vdwg.mxu0
      %v1524 = vadd.f32 %v402, %v1518
      %v1525 = vadd.f32 %v403, %v1521
      %1526 = vst.msk [vmem:[#allocation2] sm:$0xff] %vm465, %v1524
      %1527 = vst.msk [vmem:[#allocation2 + $0x8] sm:$0xff] %vm465, %v1525
      %p1528 = scmp.eq.s32.totalorder %s24, 1
      // Predicated region
      $region57: #{decoder_only_forward.1} parent=51 // pred_check
        %p1529 = pneg %p1528
      $region58: #{decoder_only_forward.1} parent=51 // pred_check_branch
        %1531 = sbr.rel (%p1529) target = $region60
      $region59: #{decoder_only_forward.1} parent=51 // pred_region
        %v1532 = vpack.c.bf16 %v1525, %v1524
        %v1533 = vld [vmem:[%s6] sm:$0xf]
        %v1534 = vld [vmem:[%s6 + $0x4] sm:$0xf]
        %v1535 = vld [vmem:[%s6 + $0x8] sm:$0xf]
        %v1536 = vld [vmem:[%s6 + $0xc] sm:$0xf]
        %v1537 = vld [vmem:[%s6 + $0x10] sm:$0xf]
        %v1538 = vld [vmem:[%s6 + $0x14] sm:$0xf]
        %v1539 = vld [vmem:[%s6 + $0x18] sm:$0xf]
        %v1540 = vld [vmem:[%s6 + $0x1c] sm:$0xf]
        %v1541 = vld [vmem:[%s7] sm:$0x1]
        %v1543 = vlaneseq
        %v1544 = vshrl.u32 %v1543, 7
        %v1545 = vsub.s32 0, %v1544
        %v1546 = vrot.slane %v1541, %v1545
        %v1556 = vunpack.c.l.b16 %v1533
        %v1557 = vunpack.c.l.b16 %v1534
        %v1558 = vunpack.c.l.b16 %v1535
        %v1559 = vunpack.c.l.b16 %v1536
        %v1560 = vunpack.c.l.b16 %v1537
        %v1561 = vunpack.c.l.b16 %v1538
        %v1562 = vunpack.c.l.b16 %v1539
        %v1563 = vunpack.c.l.b16 %v1540
        %v1564 = vpack.c.b16 %v1557, %v1556
        %v1565 = vpack.c.b16 %v1559, %v1558
        %v1566 = vpack.c.b16 %v1561, %v1560
        %v1567 = vpack.c.b16 %v1563, %v1562
        %v1573 = vsel %vm465, %v1532, 0
        %1575 = vmatprep.subr.bf16.mxu0 0
        %1576 = vmatpush1.bf16.msra.mxu0 %v1564
        %1577 = vmatprep.subr.bf16.mxu0 0
        %1578 = vmatpush1.bf16.msra.mxu0 %v1565
        %1579 = vmatprep.subr.bf16.mxu0 0
        %1580 = vmatpush1.bf16.msra.mxu0 %v1566
        %1581 = vmatprep.subr.bf16.mxu0 0
        %1582 = vmatpush1.bf16.msra.mxu0 %v1567
        %1583 = vmatprep.subr.bf16.mxu0 0
        %1584 = vmatpush1.bf16.msra.mxu0 0
        %1585 = vmatprep.subr.bf16.mxu0 0
        %1586 = vmatpush1.bf16.msra.mxu0 0
        %1587 = vmatprep.subr.bf16.mxu0 0
        %1588 = vmatpush1.bf16.msra.mxu0 0
        %1589 = vmatprep.subr.bf16.mxu0 0
        %1590 = vmatpush1.bf16.msra.mxu0 0
        %1591 = vmatprep.subr.bf16.mxu0 0
        %1592 = vmatpush1.bf16.msra.mxu0 0
        %1593 = vmatprep.subr.bf16.mxu0 0
        %1594 = vmatpush1.bf16.msra.mxu0 0
        %1595 = vmatprep.subr.bf16.mxu0 0
        %1596 = vmatpush1.bf16.msra.mxu0 0
        %1597 = vmatprep.subr.bf16.mxu0 0
        %1598 = vmatpush1.bf16.msra.mxu0 0
        %1599 = vmatprep.subr.bf16.mxu0 0
        %1600 = vmatpush1.bf16.msra.mxu0 0
        %1601 = vmatprep.subr.bf16.mxu0 0
        %1602 = vmatpush1.bf16.msra.mxu0 0
        %1603 = vmatprep.subr.bf16.mxu0 0
        %1604 = vmatpush1.bf16.msra.mxu0 0
        %1605 = vmatprep.subr.bf16.mxu0 0
        %1606 = vmatpush1.bf16.msra.mxu0 0
        %1607 = vmatprep.mubr.bf16.mxu0 0
        %1608 = vmatmul.mubr.bf16.gmra.mrb[0].mxu0 %v1573
        %v1609 = vpop.f32.mrb[0].mxu0
        %v1610 = vadd.f32 %v1546, %v1609
        %v1611 = vpop.f32.mrb[0].mxu0
        %v1612 = vpop.f32.mrb[0].mxu0
        %v1613 = vadd.f32 %v1546, %v1612
        %v1614 = vpop.f32.mrb[0].mxu0
        %1615 = vdwg.mxu0
        %1616 = vmax.xlane.f32.xlu0 %v1610
        %v1617 = vpop.xlane.xlu0 %1616
        %1618 = vmax.xlane.f32.xlu0 %v1613
        %v1619 = vpop.xlane.xlu0 %1618
        %v1620 = vsub.f32 %v1610, %v1617
        %v1621 = vsub.f32 %v1613, %v1619
        %v1622 = vmul.f32 %v1620, 1.442695
        %v1623 = vpow.pop %v1622
        %v1624 = vmul.f32 %v1621, 1.442695
        %v1625 = vpow.pop %v1624
        %1626 = vadd.xlane.f32.xlu0 %v1623
        %v1627 = vpop.xlane.xlu0 %1626
        %1628 = vadd.xlane.f32.xlu0 %v1625
        %v1629 = vpop.xlane.xlu0 %1628
        %v1630 = vrcp.pop %v1627
        %v1631 = vmul.f32 %v1623, %v1630
        %v1632 = vrcp.pop %v1629
        %v1633 = vmul.f32 %v1625, %v1632
        %1634 = vst [vmem:[%s390] sm:$0xff] %v1631
        %1635 = vst [vmem:[%s390 + $0x8] sm:$0xff] %v1633
      $region60: #{decoder_only_forward.1} parent=51 // pred_fallthru
        _
      %s1636 = smul.u32 2, %s23
      %p1637 = scmp.lt.s32.totalorder %s1636, 1
      %s1638 = scalar_select %p1637, %s1636, 1
      %s1639 = smul.addr %s1638, 8
      %s1640 = scalar_lea.vmem %s8, %s1639
      // Predicated region
      $region61: #{decoder_only_forward.1} parent=51 // pred_check
        %p1641 = pneg %p242
      $region62: #{decoder_only_forward.1} parent=51 // pred_check_branch
        %1643 = sbr.rel (%p1641) target = $region64
      $region63: #{decoder_only_forward.1} parent=51 // pred_region
        %s1644 = smul.u32 2, %s23
      $region64: #{decoder_only_forward.1} parent=51 // pred_fallthru
        _
      // Predicated region
      $region65: #{decoder_only_forward.1} parent=51 // pred_check
        %p1645 = pneg %p242
      $region66: #{decoder_only_forward.1} parent=51 // pred_check_branch
        %1647 = sbr.rel (%p1645) target = $region68
      $region67: #{decoder_only_forward.1} parent=51 // pred_region
        %s1648 = smul.u32 2, %s23
        %p1649 = scmp.lt.s32.totalorder %s1648, 1
        %s1650 = scalar_select %p1649, %s1648, 1
        %s1651 = smul.addr %s1650, 8
        %s1652 = scalar_lea.vmem %s8, %s1651
      $region68: #{decoder_only_forward.1} parent=51 // pred_fallthru
        _
    $region52: #{decoder_only_forward.1} parent=5 // pred_fallthru
      _
    %p1653 = scmp.le.s32.totalorder 2, %s14
    // Predicated region
    $region69: #{decoder_only_forward.1} parent=5 // pred_check
      %p1654 = pneg %p1653
    $region70: #{decoder_only_forward.1} parent=5 // pred_check_branch
      %1656 = sbr.rel (%p1654) target = $region72
    $region71: #{decoder_only_forward.1} parent=5 // pred_region
      %s1657 = ssub.s32 %s14, 2
    $region72: #{decoder_only_forward.1} parent=5 // pred_fallthru
      _
  $region6: #{decoder_only_forward.1} parent=0 // loop_footer
    %s18 = sadd.s32 1, %s14
  $region7: #{decoder_only_forward.1} parent=0 // loop_footer_branch
    %13 = sbr.rel target = $region3
  $region8: #{decoder_only_forward.1} parent=0 // loop_exit
    _

</llo_original>
